<compile_context>
chip_gen: v6e
topology: v6e:2x2x1
jax: 0.10.0
libtpu: 0.0.40
codegen_flags: <defaults>
</compile_context>

<pallas_src>
import jax
import jax.numpy as jnp
from jax.experimental import pallas as pl
from jax.experimental.pallas import tpu as pltpu


def _round_up(x, m):
    return (x + m - 1) // m * m


def _fused_mlp_kernel(x_ref, w1_ref, b1_ref, w2_ref, b2_ref, w3_ref, b3_ref,
                      o_ref):
    # x may arrive as f32 (aligned fast path) or bf16 (padded path); cast
    # on-chip so the wrapper never needs a separate cast pass over HBM.
    x = x_ref[...].astype(jnp.bfloat16)
    # Layer 1: fc1 (BN1 scale pre-folded into weight columns) -> bias -> relu
    h1 = jnp.dot(x, w1_ref[...], preferred_element_type=jnp.float32)
    h1 = jnp.maximum(h1 + b1_ref[...], 0.0)
    # drop1: identity in eval mode
    # Layer 2: fc2 (BN2 scale pre-folded) -> bias -> relu
    h2 = jnp.dot(h1.astype(jnp.bfloat16), w2_ref[...],
                 preferred_element_type=jnp.float32)
    h2 = jnp.maximum(h2 + b2_ref[...], 0.0)
    # drop2: identity in eval mode
    # Output layer (class dim padded to 128 lanes -> unmasked stores)
    o_ref[...] = jnp.dot(h2.astype(jnp.bfloat16), w3_ref[...],
                         preferred_element_type=jnp.float32) + b3_ref[...]


def simple_mlp_forward(x, params, num_classes, *, tm=None):
    """x: (B, C, L) float32 (NCL). Returns logits (B, num_classes) float32."""
    (w1t, b1, w2t, b2, w3t, b3) = params
    k_pad, h1 = w1t.shape
    h2 = w2t.shape[1]
    nc_pad = w3t.shape[1]

    B = x.shape[0]
    x2d = x.reshape(B, -1)                      # x.view(B, -1)
    k = x2d.shape[1]
    assert k <= k_pad

    if tm is None:
        # 16 = bf16 sublane tile; cap at 256 to fill the 256-wide MXU on
        # v6e/v7x without blowing the v7x 64 MiB VMEM budget.
        tm = max(16, min(256, _round_up(B, 16)))
    m_pad = _round_up(max(B, 1), tm)

    if (m_pad != B) or (k_pad != k):
        # Single fused pad+convert pass.  Row padding is sliced off at the
        # end; K padding hits zero rows of w1t so its values are irrelevant.
        x_in = jnp.pad(x2d.astype(jnp.bfloat16),
                       ((0, m_pad - B), (0, k_pad - k)))
    else:
        # Aligned fast path: no wrapper pass at all, kernel casts on-chip.
        x_in = x2d

    grid = (m_pad // tm,)

    # Weights/biases never change across grid steps -> single buffer.
    resident = lambda shape: pl.BlockSpec(shape, lambda i: (0, 0),
                                          pipeline_mode=pl.Buffered(1))

    # VMEM budget: double-buffered x/out tiles + resident weights + f32
    # intermediates, plus headroom for compiler scratch.
    itemsize = jnp.dtype(x_in.dtype).itemsize
    weight_bytes = ((w1t.size + w2t.size + w3t.size) * 2
                    + (b1.size + b2.size + b3.size) * 4)
    tile_bytes = 2 * tm * k_pad * itemsize + 2 * tm * nc_pad * 4
    interm_bytes = tm * (h1 + h2) * 4
    vmem_limit = max(int(1.25 * (weight_bytes + tile_bytes + interm_bytes))
                     + (2 << 20), 16 << 20)

    flops = 2 * m_pad * (k_pad * h1 + h1 * h2 + h2 * nc_pad)
    bytes_accessed = (x_in.size * itemsize        # activations in
                      + weight_bytes              # weights + biases
                      + m_pad * nc_pad * 4)       # f32 logits out

    out = pl.pallas_call(
        _fused_mlp_kernel,
        out_shape=jax.ShapeDtypeStruct((m_pad, nc_pad), jnp.float32),
        grid=grid,
        in_specs=[
            pl.BlockSpec((tm, k_pad), lambda i: (i, 0)),   # x tile moves
            resident((k_pad, h1)), resident((1, h1)),      # w1 / fused bias1
            resident((h1, h2)), resident((1, h2)),         # w2 / fused bias2
            resident((h2, nc_pad)), resident((1, nc_pad)), # w3 / bias3
        ],
        out_specs=pl.BlockSpec((tm, nc_pad), lambda i: (i, 0)),
        compiler_params=pltpu.CompilerParams(
            dimension_semantics=("parallel",),      # megacore split on v7x
            vmem_limit_bytes=vmem_limit,
        ),
        cost_estimate=pl.CostEstimate(
            flops=flops, transcendentals=0, bytes_accessed=bytes_accessed),
    )(x_in, w1t, b1, w2t, b2, w3t, b3)

    # TODO(synk): consumers that can read the padded (m_pad, 128) slab
    # directly avoid this extra slice pass.
    return out[:B, :num_classes]


def init_params(key, in_feats, num_classes, h1=1024, h2=512, eps=1e-5):
    """Deterministic synthetic parameters matching SimpleMLP's shapes.

    Returns (w1t, fb1, w2t, fb2, w3t, b3) with BN folded into the weight
    columns / fused biases, K padded to a multiple of 128 for layer 1, the
    class dim padded to 128 for the output layer, and weights stored in bf16.
    """
    k_pad = _round_up(in_feats, 128)
    nc_pad = _round_up(num_classes, 128)
    ks = jax.random.split(key, 14)

    def linear(kw, kb, fan_in, fan_out):
        bound = 1.0 / jnp.sqrt(fan_in)
        w = jax.random.uniform(kw, (fan_out, fan_in), jnp.float32, -bound, bound)
        b = jax.random.uniform(kb, (fan_out,), jnp.float32, -bound, bound)
        return w, b

    w1, bias1 = linear(ks[0], ks[1], in_feats, h1)
    w2, bias2 = linear(ks[2], ks[3], h1, h2)
    w3, bias3 = linear(ks[4], ks[5], h2, num_classes)

    def bn(kg, kb, km, kv, n):
        gamma = 1.0 + 0.1 * jax.random.normal(kg, (n,), jnp.float32)
        beta = 0.1 * jax.random.normal(kb, (n,), jnp.float32)
        mean = 0.1 * jax.random.normal(km, (n,), jnp.float32)
        var = jax.nn.softplus(jax.random.normal(kv, (n,), jnp.float32)) + 0.5
        return gamma, beta, mean, var

    g1, be1, m1, v1 = bn(ks[6], ks[7], ks[8], ks[9], h1)
    g2, be2, m2, v2 = bn(ks[10], ks[11], ks[12], ks[13], h2)

    # Inference BN fold:  bn(fc(x)) = (x @ W^T + b) * s + t
    #                              = x @ (W^T * s) + (b * s + t)
    # with s = gamma/sqrt(var+eps), t = beta - mean*s.
    s1 = g1 / jnp.sqrt(v1 + eps)
    fb1 = bias1 * s1 + (be1 - m1 * s1)
    s2 = g2 / jnp.sqrt(v2 + eps)
    fb2 = bias2 * s2 + (be2 - m2 * s2)

    w1t = w1.T * s1[None, :]            # (in_feats, h1), BN1 folded in
    w2t = w2.T * s2[None, :]            # (h1, h2), BN2 folded in
    w3t = w3.T                          # (h2, num_classes)

    # Pad the layer-1 contraction dim (rows MUST be zero so x's K-pad values
    # are irrelevant) and the output class dim to 128.
    w1t_p = jnp.zeros((k_pad, h1), jnp.float32).at[:in_feats].set(w1t)
    w3t_p = jnp.zeros((h2, nc_pad), jnp.float32).at[:, :num_classes].set(w3t)
    b3_p = jnp.zeros((nc_pad,), jnp.float32).at[:num_classes].set(bias3)

    return (
        w1t_p.astype(jnp.bfloat16), fb1.reshape(1, -1).astype(jnp.float32),
        w2t.astype(jnp.bfloat16), fb2.reshape(1, -1).astype(jnp.float32),
        w3t_p.astype(jnp.bfloat16), b3_p.reshape(1, -1).astype(jnp.float32),
    )


def _ref_forward(x_bf16, params):
    """Pure-JAX reference with identical bf16-in / f32-accumulate math."""
    w1t, b1, w2t, b2, w3t, b3 = params
    h1 = jnp.maximum(
        jnp.dot(x_bf16, w1t, preferred_element_type=jnp.float32) + b1, 0.0)
    h2 = jnp.maximum(
        jnp.dot(h1.astype(jnp.bfloat16), w2t,
                preferred_element_type=jnp.float32) + b2, 0.0)
    return jnp.dot(h2.astype(jnp.bfloat16), w3t,
                   preferred_element_type=jnp.float32) + b3


if __name__ == "__main__":
    # Small shapes consistent with the module's forward:
    # input_channels=4, signal_length=16 -> in_feats = 64, num_classes=8.
    B, C, L, NUM_CLASSES = 2, 4, 16, 8
    in_feats = C * L

    key = jax.random.PRNGKey(0)
    kx, kp = jax.random.split(key)
    x = jax.random.normal(kx, (B, C, L), jnp.float32)   # layout: NCL

    params = init_params(kp, in_feats, NUM_CLASSES)

    logits = simple_mlp_forward(x, params, NUM_CLASSES)
    logits = jax.block_until_ready(logits)
    assert logits.shape == (B, NUM_CLASSES)

    # Reference check (same bf16 weights / f32 accumulation as the kernel).
    k_pad = params[0].shape[0]
    x2d = x.reshape(B, -1)
    x_ref = jnp.zeros((B, k_pad), jnp.bfloat16)
    x_ref = x_ref.at[:, :in_feats].set(x2d.astype(jnp.bfloat16))
    ref = _ref_forward(x_ref, params)[:, :NUM_CLASSES]

    assert jnp.allclose(logits, ref, atol=2e-2, rtol=2e-2), (
        float(jnp.max(jnp.abs(logits - ref))))

    print("KERNEL_OK")
</pallas_src>

<mosaic_0001>
module attributes {stable_mosaic.version = 11 : i64} {
  func.func @_fused_mlp_kernel(%arg0: i32, %arg1: memref<16x128xbf16, #tpu.memory_space<vmem>>, %arg2: memref<128x1024xbf16, #tpu.memory_space<vmem>>, %arg3: memref<1x1024xf32, #tpu.memory_space<vmem>>, %arg4: memref<1024x512xbf16, #tpu.memory_space<vmem>>, %arg5: memref<1x512xf32, #tpu.memory_space<vmem>>, %arg6: memref<512x128xbf16, #tpu.memory_space<vmem>>, %arg7: memref<1x128xf32, #tpu.memory_space<vmem>>, %arg8: memref<16x128xf32, #tpu.memory_space<vmem>>) attributes {dimension_semantics = [#tpu.dimension_semantics<parallel>], iteration_bounds = array<i64: 1>, scalar_prefetch = 0 : i64, scratch_operands = 0 : i64, tpu.core_type = #tpu.core_type<tc>, window_params = [{transform_indices = @transform_0, window_bounds = array<i64: 16, 128>}, {pipeline_mode = #tpu.pipeline_mode<synchronous>, transform_indices = @transform_1, window_bounds = array<i64: 128, 1024>}, {pipeline_mode = #tpu.pipeline_mode<synchronous>, transform_indices = @transform_2, window_bounds = array<i64: 1, 1024>}, {pipeline_mode = #tpu.pipeline_mode<synchronous>, transform_indices = @transform_3, window_bounds = array<i64: 1024, 512>}, {pipeline_mode = #tpu.pipeline_mode<synchronous>, transform_indices = @transform_4, window_bounds = array<i64: 1, 512>}, {pipeline_mode = #tpu.pipeline_mode<synchronous>, transform_indices = @transform_5, window_bounds = array<i64: 512, 128>}, {pipeline_mode = #tpu.pipeline_mode<synchronous>, transform_indices = @transform_6, window_bounds = array<i64: 1, 128>}, {transform_indices = @transform_7, window_bounds = array<i64: 16, 128>}]} {
    %c0 = arith.constant 0 : index
    %c0_0 = arith.constant 0 : index
    %0 = vector.load %arg1[%c0, %c0_0] : memref<16x128xbf16, #tpu.memory_space<vmem>>, vector<16x128xbf16>
    %c0_1 = arith.constant 0 : index
    %c0_2 = arith.constant 0 : index
    %1 = vector.load %arg2[%c0_1, %c0_2] : memref<128x1024xbf16, #tpu.memory_space<vmem>>, vector<128x1024xbf16>
    %cst = arith.constant dense<0.000000e+00> : vector<16x1024xf32>
    %2 = tpu.matmul %0, %1, %cst {dimension_numbers = #tpu.dot_dimension_numbers<[1], [0], [0], [1], [0, 0, 1, 1], [], []>} : vector<16x128xbf16>, vector<128x1024xbf16>, vector<16x1024xf32> -> vector<16x1024xf32>
    %c0_3 = arith.constant 0 : index
    %c0_4 = arith.constant 0 : index
    %3 = vector.load %arg3[%c0_3, %c0_4] : memref<1x1024xf32, #tpu.memory_space<vmem>>, vector<1x1024xf32>
    %4 = vector.broadcast %3 : vector<1x1024xf32> to vector<16x1024xf32>
    %5 = arith.addf %2, %4 : vector<16x1024xf32>
    %cst_5 = arith.constant 0.000000e+00 : f32
    %6 = vector.broadcast %cst_5 : f32 to vector<16x1024xf32>
    %7 = arith.maximumf %5, %6 : vector<16x1024xf32>
    %8 = arith.truncf %7 : vector<16x1024xf32> to vector<16x1024xbf16>
    %c0_6 = arith.constant 0 : index
    %c0_7 = arith.constant 0 : index
    %9 = vector.load %arg4[%c0_6, %c0_7] : memref<1024x512xbf16, #tpu.memory_space<vmem>>, vector<1024x512xbf16>
    %cst_8 = arith.constant dense<0.000000e+00> : vector<16x512xf32>
    %10 = tpu.matmul %8, %9, %cst_8 {dimension_numbers = #tpu.dot_dimension_numbers<[1], [0], [0], [1], [0, 0, 1, 1], [], []>} : vector<16x1024xbf16>, vector<1024x512xbf16>, vector<16x512xf32> -> vector<16x512xf32>
    %c0_9 = arith.constant 0 : index
    %c0_10 = arith.constant 0 : index
    %11 = vector.load %arg5[%c0_9, %c0_10] : memref<1x512xf32, #tpu.memory_space<vmem>>, vector<1x512xf32>
    %12 = vector.broadcast %11 : vector<1x512xf32> to vector<16x512xf32>
    %13 = arith.addf %10, %12 : vector<16x512xf32>
    %cst_11 = arith.constant 0.000000e+00 : f32
    %14 = vector.broadcast %cst_11 : f32 to vector<16x512xf32>
    %15 = arith.maximumf %13, %14 : vector<16x512xf32>
    %16 = arith.truncf %15 : vector<16x512xf32> to vector<16x512xbf16>
    %c0_12 = arith.constant 0 : index
    %c0_13 = arith.constant 0 : index
    %17 = vector.load %arg6[%c0_12, %c0_13] : memref<512x128xbf16, #tpu.memory_space<vmem>>, vector<512x128xbf16>
    %cst_14 = arith.constant dense<0.000000e+00> : vector<16x128xf32>
    %18 = tpu.matmul %16, %17, %cst_14 {dimension_numbers = #tpu.dot_dimension_numbers<[1], [0], [0], [1], [0, 0, 1, 1], [], []>} : vector<16x512xbf16>, vector<512x128xbf16>, vector<16x128xf32> -> vector<16x128xf32>
    %c0_15 = arith.constant 0 : index
    %c0_16 = arith.constant 0 : index
    %19 = vector.load %arg7[%c0_15, %c0_16] : memref<1x128xf32, #tpu.memory_space<vmem>>, vector<1x128xf32>
    %20 = vector.broadcast %19 : vector<1x128xf32> to vector<16x128xf32>
    %21 = arith.addf %18, %20 : vector<16x128xf32>
    %c0_17 = arith.constant 0 : index
    %c0_18 = arith.constant 0 : index
    %22 = vector.load %arg8[%c0_17, %c0_18] : memref<16x128xf32, #tpu.memory_space<vmem>>, vector<16x128xf32>
    tpu.vector_store %arg8[%c0_17, %c0_18], %21 {strides = array<i32>} : memref<16x128xf32, #tpu.memory_space<vmem>>, vector<16x128xf32>,
    return
  }
  func.func @transform_0(%arg0: i32) -> (i32, i32) {
    %c0_i32 = arith.constant 0 : i32
    %c0_i32_0 = arith.constant 0 : i32
    return %arg0, %c0_i32 : i32, i32
  }
  func.func @transform_1(%arg0: i32) -> (i32, i32) {
    %c0_i32 = arith.constant 0 : i32
    %c0_i32_0 = arith.constant 0 : i32
    %c0_i32_1 = arith.constant 0 : i32
    return %c0_i32, %c0_i32_0 : i32, i32
  }
  func.func @transform_2(%arg0: i32) -> (i32, i32) {
    %c0_i32 = arith.constant 0 : i32
    %c0_i32_0 = arith.constant 0 : i32
    %c0_i32_1 = arith.constant 0 : i32
    return %c0_i32, %c0_i32_0 : i32, i32
  }
  func.func @transform_3(%arg0: i32) -> (i32, i32) {
    %c0_i32 = arith.constant 0 : i32
    %c0_i32_0 = arith.constant 0 : i32
    %c0_i32_1 = arith.constant 0 : i32
    return %c0_i32, %c0_i32_0 : i32, i32
  }
  func.func @transform_4(%arg0: i32) -> (i32, i32) {
    %c0_i32 = arith.constant 0 : i32
    %c0_i32_0 = arith.constant 0 : i32
    %c0_i32_1 = arith.constant 0 : i32
    return %c0_i32, %c0_i32_0 : i32, i32
  }
  func.func @transform_5(%arg0: i32) -> (i32, i32) {
    %c0_i32 = arith.constant 0 : i32
    %c0_i32_0 = arith.constant 0 : i32
    %c0_i32_1 = arith.constant 0 : i32
    return %c0_i32, %c0_i32_0 : i32, i32
  }
  func.func @transform_6(%arg0: i32) -> (i32, i32) {
    %c0_i32 = arith.constant 0 : i32
    %c0_i32_0 = arith.constant 0 : i32
    %c0_i32_1 = arith.constant 0 : i32
    return %c0_i32, %c0_i32_0 : i32, i32
  }
  func.func @transform_7(%arg0: i32) -> (i32, i32) {
    %c0_i32 = arith.constant 0 : i32
    %c0_i32_0 = arith.constant 0 : i32
    return %arg0, %c0_i32 : i32, i32
  }
}

</mosaic_0001>

<llo_original>
// kernel: tpu_custom_call.1
$region0: #{tpu_custom_call.1}
  #allocation0 [shape = 'u32[]', space=smem, size = 0x4, offset = 0x4, fixed_abs, tag = 'smem constant byte address 0x4 - core index']
  #allocation1 [shape = 'u32[144,128]{1,0:T(1,128)}', space=vmem, size = 0x12000, scoped, tag = 'internal scratch']
  %s0 = inlined_call_operand.hbm [shape: bf16[16,128], index: 0, kind: input, shape index: {}]
  %s1 = inlined_call_operand.hbm [shape: bf16[128,1024], index: 1, kind: input, shape index: {}]
  %s2 = inlined_call_operand.hbm [shape: f32[1,1024], index: 2, kind: input, shape index: {}]
  %s3 = inlined_call_operand.hbm [shape: bf16[1024,512], index: 3, kind: input, shape index: {}]
  %s4 = inlined_call_operand.vmem [shape: f32[1,512], index: 4, kind: input, shape index: {}]
  %s5 = inlined_call_operand.hbm [shape: bf16[512,128], index: 5, kind: input, shape index: {}]
  %s6 = inlined_call_operand.vmem [shape: f32[1,128], index: 6, kind: input, shape index: {}]
  %s7 = inlined_call_operand.hbm [shape: f32[16,128], index: 7, kind: output, shape index: {}]
  %s8 = sld [smem:[#allocation0]]
  $region58: #{tpu_custom_call.1} parent=0
    _
  %s10 = ssub.s32 1, %s8
  %s11 = scalar_select 0, %s10, %s8
  $region1: #{tpu_custom_call.1} parent=0
    #allocation2 [shape = 'u8[4096]{0}', space=vmem, size = 0x1000, scoped, tag = 'input window, operand 0, single buffered']
    #allocation3 [shape = 's32[1]{0}', space=sflag, size = 0x4, scoped, tag = 'scoped memory for tpu_custom_call.1']
    #allocation4 [shape = 's32[1]{0}', space=sflag, size = 0x4, scoped, tag = 'scoped memory for tpu_custom_call.1']
    #allocation5 [shape = 'u8[262144]{0}', space=vmem, size = 0x40000, scoped, tag = 'input window, operand 1, single buffered']
    #allocation6 [shape = 's32[1]{0}', space=sflag, size = 0x4, scoped, tag = 'scoped memory for tpu_custom_call.1']
    #allocation7 [shape = 'u8[4096]{0}', space=vmem, size = 0x1000, scoped, tag = 'input window, operand 2, single buffered']
    #allocation8 [shape = 'u8[1048576]{0}', space=vmem, size = 0x100000, scoped, tag = 'input window, operand 3, single buffered']
    #allocation9 [shape = 's32[1]{0}', space=sflag, size = 0x4, scoped, tag = 'scoped memory for tpu_custom_call.1']
    #allocation10 [shape = 'u8[131072]{0}', space=vmem, size = 0x20000, scoped, tag = 'input window, operand 5, single buffered']
    #allocation11 [shape = 'u8[8192]{0}', space=vmem, size = 0x2000, scoped, tag = 'output window, operand 0, single buffered']
    %12 = vsyncpa [#allocation3], 0
    %13 = vsyncpa [#allocation6], 0
    %14 = vsyncpa [#allocation9], 0
    %15 = vsyncpa [#allocation4], 0
    // Predicated region
    $region2: #{tpu_custom_call.1} parent=1 // pred_check
      _
    $region3: #{tpu_custom_call.1} parent=1 // pred_check_branch
      %17 = sbr.rel (0) target = $region5
    $region4: #{tpu_custom_call.1} parent=1 // pred_region
      %s19 = ssub.s32 128, 128
      %20 = vsyncadd [#allocation3], %s19
      %s21 = sshll.u32 [#allocation2], 4
      %s22 = int_to_ptr.vmem [resolvable:$true] %s21
      %27 = dma.hbm_to_vmem [thread:$0]  %s0, 128, %s22, [#allocation3], 64, 64, 4
    $region5: #{tpu_custom_call.1} parent=1 // pred_fallthru
      _
    // Predicated region
    $region6: #{tpu_custom_call.1} parent=1 // pred_check
      _
    $region7: #{tpu_custom_call.1} parent=1 // pred_check_branch
      %29 = sbr.rel (0) target = $region9
    $region8: #{tpu_custom_call.1} parent=1 // pred_region
      %s31 = ssub.s32 8192, 8192
      %32 = vsyncadd [#allocation6], %s31
      %s33 = sshll.u32 [#allocation5], 4
      %s34 = int_to_ptr.vmem [resolvable:$true] %s33
      %39 = dma.hbm_to_vmem [thread:$0]  %s1, 8192, %s34, [#allocation6], 512, 512, 32
    $region9: #{tpu_custom_call.1} parent=1 // pred_fallthru
      _
    // Predicated region
    $region10: #{tpu_custom_call.1} parent=1 // pred_check
      _
    $region11: #{tpu_custom_call.1} parent=1 // pred_check_branch
      %41 = sbr.rel (0) target = $region13
    $region12: #{tpu_custom_call.1} parent=1 // pred_region
      %s43 = ssub.s32 128, 128
      %44 = vsyncadd [#allocation6], %s43
      %s46 = sshll.u32 [#allocation7], 4
      %s47 = int_to_ptr.vmem [resolvable:$true] %s46
      %49 = dma.hbm_to_vmem [thread:$0]  %s2, 128, %s47, [#allocation6]
    $region13: #{tpu_custom_call.1} parent=1 // pred_fallthru
      _
    // Predicated region
    $region14: #{tpu_custom_call.1} parent=1 // pred_check
      _
    $region15: #{tpu_custom_call.1} parent=1 // pred_check_branch
      %51 = sbr.rel (0) target = $region17
    $region16: #{tpu_custom_call.1} parent=1 // pred_region
      %s53 = ssub.s32 32768, 32768
      %54 = vsyncadd [#allocation9], %s53
      %s55 = sshll.u32 [#allocation8], 4
      %s56 = int_to_ptr.vmem [resolvable:$true] %s55
      %61 = dma.hbm_to_vmem [thread:$0]  %s3, 32768, %s56, [#allocation9], 256, 256, 16
    $region17: #{tpu_custom_call.1} parent=1 // pred_fallthru
      _
    // Predicated region
    $region18: #{tpu_custom_call.1} parent=1 // pred_check
      _
    $region19: #{tpu_custom_call.1} parent=1 // pred_check_branch
      %63 = sbr.rel (0) target = $region21
    $region20: #{tpu_custom_call.1} parent=1 // pred_region
      _
    $region21: #{tpu_custom_call.1} parent=1 // pred_fallthru
      _
    // Predicated region
    $region22: #{tpu_custom_call.1} parent=1 // pred_check
      _
    $region23: #{tpu_custom_call.1} parent=1 // pred_check_branch
      %65 = sbr.rel (0) target = $region25
    $region24: #{tpu_custom_call.1} parent=1 // pred_region
      %s67 = ssub.s32 4096, 4096
      %68 = vsyncadd [#allocation9], %s67
      %s69 = sshll.u32 [#allocation10], 4
      %s70 = int_to_ptr.vmem [resolvable:$true] %s69
      %75 = dma.hbm_to_vmem [thread:$0]  %s5, 4096, %s70, [#allocation9], 64, 64, 4
    $region25: #{tpu_custom_call.1} parent=1 // pred_fallthru
      _
    // Predicated region
    $region26: #{tpu_custom_call.1} parent=1 // pred_check
      _
    $region27: #{tpu_custom_call.1} parent=1 // pred_check_branch
      %77 = sbr.rel (0) target = $region29
    $region28: #{tpu_custom_call.1} parent=1 // pred_region
      _
    $region29: #{tpu_custom_call.1} parent=1 // pred_fallthru
      _
    // Predicated region
    $region30: #{tpu_custom_call.1} parent=1 // pred_check
      _
    $region31: #{tpu_custom_call.1} parent=1 // pred_check_branch
      %79 = sbr.rel (0) target = $region33
    $region32: #{tpu_custom_call.1} parent=1 // pred_region
      %80 = dma.done [#allocation3], 128
    $region33: #{tpu_custom_call.1} parent=1 // pred_fallthru
      _
    // Predicated region
    $region34: #{tpu_custom_call.1} parent=1 // pred_check
      _
    $region35: #{tpu_custom_call.1} parent=1 // pred_check_branch
      %82 = sbr.rel (0) target = $region37
    $region36: #{tpu_custom_call.1} parent=1 // pred_region
      %83 = dma.done [#allocation6], 8192
    $region37: #{tpu_custom_call.1} parent=1 // pred_fallthru
      _
    // Predicated region
    $region38: #{tpu_custom_call.1} parent=1 // pred_check
      _
    $region39: #{tpu_custom_call.1} parent=1 // pred_check_branch
      %85 = sbr.rel (0) target = $region41
    $region40: #{tpu_custom_call.1} parent=1 // pred_region
      %86 = dma.done [#allocation6], 128
    $region41: #{tpu_custom_call.1} parent=1 // pred_fallthru
      _
    // Predicated region
    $region42: #{tpu_custom_call.1} parent=1 // pred_check
      _
    $region43: #{tpu_custom_call.1} parent=1 // pred_check_branch
      %88 = sbr.rel (0) target = $region45
    $region44: #{tpu_custom_call.1} parent=1 // pred_region
      %89 = dma.done [#allocation9], 32768
    $region45: #{tpu_custom_call.1} parent=1 // pred_fallthru
      _
    // Predicated region
    $region46: #{tpu_custom_call.1} parent=1 // pred_check
      _
    $region47: #{tpu_custom_call.1} parent=1 // pred_check_branch
      %91 = sbr.rel (0) target = $region49
    $region48: #{tpu_custom_call.1} parent=1 // pred_region
      %92 = dma.done [#allocation9], 4096
    $region49: #{tpu_custom_call.1} parent=1 // pred_fallthru
      _
    %v94 = vld [vmem:[#allocation2] sm:$0xf]
    %v95 = vld [vmem:[#allocation2 + $0x4] sm:$0xf]
    %v96 = vld [vmem:[#allocation5] sm:$0xff]
    %v97 = vld [vmem:[#allocation5 + $0x8] sm:$0xff]
    %v98 = vld [vmem:[#allocation5 + $0x10] sm:$0xff]
    %v99 = vld [vmem:[#allocation5 + $0x18] sm:$0xff]
    %v100 = vld [vmem:[#allocation5 + $0x20] sm:$0xff]
    %v101 = vld [vmem:[#allocation5 + $0x28] sm:$0xff]
    %v102 = vld [vmem:[#allocation5 + $0x30] sm:$0xff]
    %v103 = vld [vmem:[#allocation5 + $0x38] sm:$0xff]
    %v104 = vld [vmem:[#allocation5 + $0x40] sm:$0xff]
    %v105 = vld [vmem:[#allocation5 + $0x48] sm:$0xff]
    %v106 = vld [vmem:[#allocation5 + $0x50] sm:$0xff]
    %v107 = vld [vmem:[#allocation5 + $0x58] sm:$0xff]
    %v108 = vld [vmem:[#allocation5 + $0x60] sm:$0xff]
    %v109 = vld [vmem:[#allocation5 + $0x68] sm:$0xff]
    %v110 = vld [vmem:[#allocation5 + $0x70] sm:$0xff]
    %v111 = vld [vmem:[#allocation5 + $0x78] sm:$0xff]
    %v112 = vld [vmem:[#allocation5 + $0x80] sm:$0xff]
    %v113 = vld [vmem:[#allocation5 + $0x88] sm:$0xff]
    %v114 = vld [vmem:[#allocation5 + $0x90] sm:$0xff]
    %v115 = vld [vmem:[#allocation5 + $0x98] sm:$0xff]
    %v116 = vld [vmem:[#allocation5 + $0xa0] sm:$0xff]
    %v117 = vld [vmem:[#allocation5 + $0xa8] sm:$0xff]
    %v118 = vld [vmem:[#allocation5 + $0xb0] sm:$0xff]
    %v119 = vld [vmem:[#allocation5 + $0xb8] sm:$0xff]
    %v120 = vld [vmem:[#allocation5 + $0xc0] sm:$0xff]
    %v121 = vld [vmem:[#allocation5 + $0xc8] sm:$0xff]
    %v122 = vld [vmem:[#allocation5 + $0xd0] sm:$0xff]
    %v123 = vld [vmem:[#allocation5 + $0xd8] sm:$0xff]
    %v124 = vld [vmem:[#allocation5 + $0xe0] sm:$0xff]
    %v125 = vld [vmem:[#allocation5 + $0xe8] sm:$0xff]
    %v126 = vld [vmem:[#allocation5 + $0xf0] sm:$0xff]
    %v127 = vld [vmem:[#allocation5 + $0xf8] sm:$0xff]
    %v128 = vld [vmem:[#allocation5 + $0x100] sm:$0xff]
    %v129 = vld [vmem:[#allocation5 + $0x108] sm:$0xff]
    %v130 = vld [vmem:[#allocation5 + $0x110] sm:$0xff]
    %v131 = vld [vmem:[#allocation5 + $0x118] sm:$0xff]
    %v132 = vld [vmem:[#allocation5 + $0x120] sm:$0xff]
    %v133 = vld [vmem:[#allocation5 + $0x128] sm:$0xff]
    %v134 = vld [vmem:[#allocation5 + $0x130] sm:$0xff]
    %v135 = vld [vmem:[#allocation5 + $0x138] sm:$0xff]
    %v136 = vld [vmem:[#allocation5 + $0x140] sm:$0xff]
    %v137 = vld [vmem:[#allocation5 + $0x148] sm:$0xff]
    %v138 = vld [vmem:[#allocation5 + $0x150] sm:$0xff]
    %v139 = vld [vmem:[#allocation5 + $0x158] sm:$0xff]
    %v140 = vld [vmem:[#allocation5 + $0x160] sm:$0xff]
    %v141 = vld [vmem:[#allocation5 + $0x168] sm:$0xff]
    %v142 = vld [vmem:[#allocation5 + $0x170] sm:$0xff]
    %v143 = vld [vmem:[#allocation5 + $0x178] sm:$0xff]
    %v144 = vld [vmem:[#allocation5 + $0x180] sm:$0xff]
    %v145 = vld [vmem:[#allocation5 + $0x188] sm:$0xff]
    %v146 = vld [vmem:[#allocation5 + $0x190] sm:$0xff]
    %v147 = vld [vmem:[#allocation5 + $0x198] sm:$0xff]
    %v148 = vld [vmem:[#allocation5 + $0x1a0] sm:$0xff]
    %v149 = vld [vmem:[#allocation5 + $0x1a8] sm:$0xff]
    %v150 = vld [vmem:[#allocation5 + $0x1b0] sm:$0xff]
    %v151 = vld [vmem:[#allocation5 + $0x1b8] sm:$0xff]
    %v152 = vld [vmem:[#allocation5 + $0x1c0] sm:$0xff]
    %v153 = vld [vmem:[#allocation5 + $0x1c8] sm:$0xff]
    %v154 = vld [vmem:[#allocation5 + $0x1d0] sm:$0xff]
    %v155 = vld [vmem:[#allocation5 + $0x1d8] sm:$0xff]
    %v156 = vld [vmem:[#allocation5 + $0x1e0] sm:$0xff]
    %v157 = vld [vmem:[#allocation5 + $0x1e8] sm:$0xff]
    %v158 = vld [vmem:[#allocation5 + $0x1f0] sm:$0xff]
    %v159 = vld [vmem:[#allocation5 + $0x1f8] sm:$0xff]
    %v160 = vld [vmem:[#allocation7] sm:$0xff]
    %v162 = vlaneseq
    %v163 = vshrl.u32 %v162, 7
    %v164 = vsub.s32 0, %v163
    %v165 = vrot.slane %v160, %v164
    %v166 = vlaneseq
    %v167 = vshrl.u32 %v166, 7
    %v168 = vsub.s32 1, %v167
    %v169 = vrot.slane %v160, %v168
    %v170 = vlaneseq
    %v171 = vshrl.u32 %v170, 7
    %v172 = vsub.s32 2, %v171
    %v173 = vrot.slane %v160, %v172
    %v174 = vlaneseq
    %v175 = vshrl.u32 %v174, 7
    %v176 = vsub.s32 3, %v175
    %v177 = vrot.slane %v160, %v176
    %v178 = vlaneseq
    %v179 = vshrl.u32 %v178, 7
    %v180 = vsub.s32 4, %v179
    %v181 = vrot.slane %v160, %v180
    %v182 = vlaneseq
    %v183 = vshrl.u32 %v182, 7
    %v184 = vsub.s32 5, %v183
    %v185 = vrot.slane %v160, %v184
    %v186 = vlaneseq
    %v187 = vshrl.u32 %v186, 7
    %v188 = vsub.s32 6, %v187
    %v189 = vrot.slane %v160, %v188
    %v190 = vlaneseq
    %v191 = vshrl.u32 %v190, 7
    %v192 = vsub.s32 7, %v191
    %v193 = vrot.slane %v160, %v192
    %v204 = vunpack.c.l.b16 %v94
    %v205 = vunpack.c.l.b16 %v95
    %v206 = vpack.c.b16 %v205, %v204
    %v272 = vunpack.c.l.b16 %v96
    %v273 = vunpack.c.h.b16 %v96
    %v274 = vunpack.c.l.b16 %v97
    %v275 = vunpack.c.h.b16 %v97
    %v276 = vunpack.c.l.b16 %v98
    %v277 = vunpack.c.h.b16 %v98
    %v278 = vunpack.c.l.b16 %v99
    %v279 = vunpack.c.h.b16 %v99
    %v280 = vunpack.c.l.b16 %v100
    %v281 = vunpack.c.h.b16 %v100
    %v282 = vunpack.c.l.b16 %v101
    %v283 = vunpack.c.h.b16 %v101
    %v284 = vunpack.c.l.b16 %v102
    %v285 = vunpack.c.h.b16 %v102
    %v286 = vunpack.c.l.b16 %v103
    %v287 = vunpack.c.h.b16 %v103
    %v288 = vunpack.c.l.b16 %v104
    %v289 = vunpack.c.h.b16 %v104
    %v290 = vunpack.c.l.b16 %v105
    %v291 = vunpack.c.h.b16 %v105
    %v292 = vunpack.c.l.b16 %v106
    %v293 = vunpack.c.h.b16 %v106
    %v294 = vunpack.c.l.b16 %v107
    %v295 = vunpack.c.h.b16 %v107
    %v296 = vunpack.c.l.b16 %v108
    %v297 = vunpack.c.h.b16 %v108
    %v298 = vunpack.c.l.b16 %v109
    %v299 = vunpack.c.h.b16 %v109
    %v300 = vunpack.c.l.b16 %v110
    %v301 = vunpack.c.h.b16 %v110
    %v302 = vunpack.c.l.b16 %v111
    %v303 = vunpack.c.h.b16 %v111
    %v304 = vunpack.c.l.b16 %v112
    %v305 = vunpack.c.h.b16 %v112
    %v306 = vunpack.c.l.b16 %v113
    %v307 = vunpack.c.h.b16 %v113
    %v308 = vunpack.c.l.b16 %v114
    %v309 = vunpack.c.h.b16 %v114
    %v310 = vunpack.c.l.b16 %v115
    %v311 = vunpack.c.h.b16 %v115
    %v312 = vunpack.c.l.b16 %v116
    %v313 = vunpack.c.h.b16 %v116
    %v314 = vunpack.c.l.b16 %v117
    %v315 = vunpack.c.h.b16 %v117
    %v316 = vunpack.c.l.b16 %v118
    %v317 = vunpack.c.h.b16 %v118
    %v318 = vunpack.c.l.b16 %v119
    %v319 = vunpack.c.h.b16 %v119
    %v320 = vunpack.c.l.b16 %v120
    %v321 = vunpack.c.h.b16 %v120
    %v322 = vunpack.c.l.b16 %v121
    %v323 = vunpack.c.h.b16 %v121
    %v324 = vunpack.c.l.b16 %v122
    %v325 = vunpack.c.h.b16 %v122
    %v326 = vunpack.c.l.b16 %v123
    %v327 = vunpack.c.h.b16 %v123
    %v328 = vunpack.c.l.b16 %v124
    %v329 = vunpack.c.h.b16 %v124
    %v330 = vunpack.c.l.b16 %v125
    %v331 = vunpack.c.h.b16 %v125
    %v332 = vunpack.c.l.b16 %v126
    %v333 = vunpack.c.h.b16 %v126
    %v334 = vunpack.c.l.b16 %v127
    %v335 = vunpack.c.h.b16 %v127
    %v336 = vunpack.c.l.b16 %v128
    %v337 = vunpack.c.h.b16 %v128
    %v338 = vunpack.c.l.b16 %v129
    %v339 = vunpack.c.h.b16 %v129
    %v340 = vunpack.c.l.b16 %v130
    %v341 = vunpack.c.h.b16 %v130
    %v342 = vunpack.c.l.b16 %v131
    %v343 = vunpack.c.h.b16 %v131
    %v344 = vunpack.c.l.b16 %v132
    %v345 = vunpack.c.h.b16 %v132
    %v346 = vunpack.c.l.b16 %v133
    %v347 = vunpack.c.h.b16 %v133
    %v348 = vunpack.c.l.b16 %v134
    %v349 = vunpack.c.h.b16 %v134
    %v350 = vunpack.c.l.b16 %v135
    %v351 = vunpack.c.h.b16 %v135
    %v352 = vunpack.c.l.b16 %v136
    %v353 = vunpack.c.h.b16 %v136
    %v354 = vunpack.c.l.b16 %v137
    %v355 = vunpack.c.h.b16 %v137
    %v356 = vunpack.c.l.b16 %v138
    %v357 = vunpack.c.h.b16 %v138
    %v358 = vunpack.c.l.b16 %v139
    %v359 = vunpack.c.h.b16 %v139
    %v360 = vunpack.c.l.b16 %v140
    %v361 = vunpack.c.h.b16 %v140
    %v362 = vunpack.c.l.b16 %v141
    %v363 = vunpack.c.h.b16 %v141
    %v364 = vunpack.c.l.b16 %v142
    %v365 = vunpack.c.h.b16 %v142
    %v366 = vunpack.c.l.b16 %v143
    %v367 = vunpack.c.h.b16 %v143
    %v368 = vunpack.c.l.b16 %v144
    %v369 = vunpack.c.h.b16 %v144
    %v370 = vunpack.c.l.b16 %v145
    %v371 = vunpack.c.h.b16 %v145
    %v372 = vunpack.c.l.b16 %v146
    %v373 = vunpack.c.h.b16 %v146
    %v374 = vunpack.c.l.b16 %v147
    %v375 = vunpack.c.h.b16 %v147
    %v376 = vunpack.c.l.b16 %v148
    %v377 = vunpack.c.h.b16 %v148
    %v378 = vunpack.c.l.b16 %v149
    %v379 = vunpack.c.h.b16 %v149
    %v380 = vunpack.c.l.b16 %v150
    %v381 = vunpack.c.h.b16 %v150
    %v382 = vunpack.c.l.b16 %v151
    %v383 = vunpack.c.h.b16 %v151
    %v384 = vunpack.c.l.b16 %v152
    %v385 = vunpack.c.h.b16 %v152
    %v386 = vunpack.c.l.b16 %v153
    %v387 = vunpack.c.h.b16 %v153
    %v388 = vunpack.c.l.b16 %v154
    %v389 = vunpack.c.h.b16 %v154
    %v390 = vunpack.c.l.b16 %v155
    %v391 = vunpack.c.h.b16 %v155
    %v392 = vunpack.c.l.b16 %v156
    %v393 = vunpack.c.h.b16 %v156
    %v394 = vunpack.c.l.b16 %v157
    %v395 = vunpack.c.h.b16 %v157
    %v396 = vunpack.c.l.b16 %v158
    %v397 = vunpack.c.h.b16 %v158
    %v398 = vunpack.c.l.b16 %v159
    %v399 = vunpack.c.h.b16 %v159
    %v400 = vpack.c.b16 %v280, %v272
    %v401 = vpack.c.b16 %v281, %v273
    %v402 = vpack.c.b16 %v282, %v274
    %v403 = vpack.c.b16 %v283, %v275
    %v404 = vpack.c.b16 %v284, %v276
    %v405 = vpack.c.b16 %v285, %v277
    %v406 = vpack.c.b16 %v286, %v278
    %v407 = vpack.c.b16 %v287, %v279
    %v408 = vpack.c.b16 %v296, %v288
    %v409 = vpack.c.b16 %v297, %v289
    %v410 = vpack.c.b16 %v298, %v290
    %v411 = vpack.c.b16 %v299, %v291
    %v412 = vpack.c.b16 %v300, %v292
    %v413 = vpack.c.b16 %v301, %v293
    %v414 = vpack.c.b16 %v302, %v294
    %v415 = vpack.c.b16 %v303, %v295
    %v416 = vpack.c.b16 %v312, %v304
    %v417 = vpack.c.b16 %v313, %v305
    %v418 = vpack.c.b16 %v314, %v306
    %v419 = vpack.c.b16 %v315, %v307
    %v420 = vpack.c.b16 %v316, %v308
    %v421 = vpack.c.b16 %v317, %v309
    %v422 = vpack.c.b16 %v318, %v310
    %v423 = vpack.c.b16 %v319, %v311
    %v424 = vpack.c.b16 %v328, %v320
    %v425 = vpack.c.b16 %v329, %v321
    %v426 = vpack.c.b16 %v330, %v322
    %v427 = vpack.c.b16 %v331, %v323
    %v428 = vpack.c.b16 %v332, %v324
    %v429 = vpack.c.b16 %v333, %v325
    %v430 = vpack.c.b16 %v334, %v326
    %v431 = vpack.c.b16 %v335, %v327
    %v432 = vpack.c.b16 %v344, %v336
    %v433 = vpack.c.b16 %v345, %v337
    %v434 = vpack.c.b16 %v346, %v338
    %v435 = vpack.c.b16 %v347, %v339
    %v436 = vpack.c.b16 %v348, %v340
    %v437 = vpack.c.b16 %v349, %v341
    %v438 = vpack.c.b16 %v350, %v342
    %v439 = vpack.c.b16 %v351, %v343
    %v440 = vpack.c.b16 %v360, %v352
    %v441 = vpack.c.b16 %v361, %v353
    %v442 = vpack.c.b16 %v362, %v354
    %v443 = vpack.c.b16 %v363, %v355
    %v444 = vpack.c.b16 %v364, %v356
    %v445 = vpack.c.b16 %v365, %v357
    %v446 = vpack.c.b16 %v366, %v358
    %v447 = vpack.c.b16 %v367, %v359
    %v448 = vpack.c.b16 %v376, %v368
    %v449 = vpack.c.b16 %v377, %v369
    %v450 = vpack.c.b16 %v378, %v370
    %v451 = vpack.c.b16 %v379, %v371
    %v452 = vpack.c.b16 %v380, %v372
    %v453 = vpack.c.b16 %v381, %v373
    %v454 = vpack.c.b16 %v382, %v374
    %v455 = vpack.c.b16 %v383, %v375
    %v456 = vpack.c.b16 %v392, %v384
    %v457 = vpack.c.b16 %v393, %v385
    %v458 = vpack.c.b16 %v394, %v386
    %v459 = vpack.c.b16 %v395, %v387
    %v460 = vpack.c.b16 %v396, %v388
    %v461 = vpack.c.b16 %v397, %v389
    %v462 = vpack.c.b16 %v398, %v390
    %v463 = vpack.c.b16 %v399, %v391
    %528 = vmatprep.subr.bf16.mxu0 %v457
    %529 = vmatpush1.bf16.msra.mxu0 %v456
    %530 = vmatprep.subr.bf16.mxu0 %v449
    %531 = vmatpush1.bf16.msra.mxu0 %v448
    %532 = vmatprep.subr.bf16.mxu0 %v441
    %533 = vmatpush1.bf16.msra.mxu0 %v440
    %534 = vmatprep.subr.bf16.mxu0 %v433
    %535 = vmatpush1.bf16.msra.mxu0 %v432
    %536 = vmatprep.subr.bf16.mxu0 %v425
    %537 = vmatpush1.bf16.msra.mxu0 %v424
    %538 = vmatprep.subr.bf16.mxu0 %v417
    %539 = vmatpush1.bf16.msra.mxu0 %v416
    %540 = vmatprep.subr.bf16.mxu0 %v409
    %541 = vmatpush1.bf16.msra.mxu0 %v408
    %542 = vmatprep.subr.bf16.mxu0 %v401
    %543 = vmatpush1.bf16.msra.mxu0 %v400
    %544 = vmatprep.subr.bf16.mxu0 0
    %545 = vmatpush2.bf16.msra.mxu0 0
    %546 = vmatprep.subr.bf16.mxu0 0
    %547 = vmatpush2.bf16.msra.mxu0 0
    %548 = vmatprep.subr.bf16.mxu0 0
    %549 = vmatpush2.bf16.msra.mxu0 0
    %550 = vmatprep.subr.bf16.mxu0 0
    %551 = vmatpush2.bf16.msra.mxu0 0
    %552 = vmatprep.subr.bf16.mxu0 0
    %553 = vmatpush2.bf16.msra.mxu0 0
    %554 = vmatprep.subr.bf16.mxu0 0
    %555 = vmatpush2.bf16.msra.mxu0 0
    %556 = vmatprep.subr.bf16.mxu0 0
    %557 = vmatpush2.bf16.msra.mxu0 0
    %558 = vmatprep.subr.bf16.mxu0 0
    %559 = vmatpush2.bf16.msra.mxu0 0
    %560 = vmatprep.mubr.bf16.mxu0 0
    %561 = vmatmul.mubr.bf16.gmra.mxu0 %v206
    %v562 = vpop.f32.mrf.mxu0
    %v563 = vadd.f32 %v165, %v562
    %v564 = vpop.f32.mrf.mxu0
    %v565 = vadd.f32 %v169, %v564
    %v566 = vpop.f32.mrf.mxu0
    %v567 = vadd.f32 %v165, %v566
    %v568 = vpop.f32.mrf.mxu0
    %v569 = vadd.f32 %v169, %v568
    %570 = vdwg.mxu0
    %571 = vmatprep.subr.bf16.mxu0 %v459
    %572 = vmatpush1.bf16.msra.mxu0 %v458
    %573 = vmatprep.subr.bf16.mxu0 %v451
    %574 = vmatpush1.bf16.msra.mxu0 %v450
    %575 = vmatprep.subr.bf16.mxu0 %v443
    %576 = vmatpush1.bf16.msra.mxu0 %v442
    %577 = vmatprep.subr.bf16.mxu0 %v435
    %578 = vmatpush1.bf16.msra.mxu0 %v434
    %579 = vmatprep.subr.bf16.mxu0 %v427
    %580 = vmatpush1.bf16.msra.mxu0 %v426
    %581 = vmatprep.subr.bf16.mxu0 %v419
    %582 = vmatpush1.bf16.msra.mxu0 %v418
    %583 = vmatprep.subr.bf16.mxu0 %v411
    %584 = vmatpush1.bf16.msra.mxu0 %v410
    %585 = vmatprep.subr.bf16.mxu0 %v403
    %586 = vmatpush1.bf16.msra.mxu0 %v402
    %587 = vmatprep.subr.bf16.mxu0 0
    %588 = vmatpush2.bf16.msra.mxu0 0
    %589 = vmatprep.subr.bf16.mxu0 0
    %590 = vmatpush2.bf16.msra.mxu0 0
    %591 = vmatprep.subr.bf16.mxu0 0
    %592 = vmatpush2.bf16.msra.mxu0 0
    %593 = vmatprep.subr.bf16.mxu0 0
    %594 = vmatpush2.bf16.msra.mxu0 0
    %595 = vmatprep.subr.bf16.mxu0 0
    %596 = vmatpush2.bf16.msra.mxu0 0
    %597 = vmatprep.subr.bf16.mxu0 0
    %598 = vmatpush2.bf16.msra.mxu0 0
    %599 = vmatprep.subr.bf16.mxu0 0
    %600 = vmatpush2.bf16.msra.mxu0 0
    %601 = vmatprep.subr.bf16.mxu0 0
    %602 = vmatpush2.bf16.msra.mxu0 0
    %603 = vmatprep.mubr.bf16.mxu0 0
    %604 = vmatmul.mubr.bf16.gmra.mxu0 %v206
    %v605 = vpop.f32.mrf.mxu0
    %v606 = vadd.f32 %v173, %v605
    %v607 = vpop.f32.mrf.mxu0
    %v608 = vadd.f32 %v177, %v607
    %v609 = vpop.f32.mrf.mxu0
    %v610 = vadd.f32 %v173, %v609
    %v611 = vpop.f32.mrf.mxu0
    %v612 = vadd.f32 %v177, %v611
    %613 = vdwg.mxu0
    %614 = vmatprep.subr.bf16.mxu0 %v461
    %615 = vmatpush1.bf16.msra.mxu0 %v460
    %616 = vmatprep.subr.bf16.mxu0 %v453
    %617 = vmatpush1.bf16.msra.mxu0 %v452
    %618 = vmatprep.subr.bf16.mxu0 %v445
    %619 = vmatpush1.bf16.msra.mxu0 %v444
    %620 = vmatprep.subr.bf16.mxu0 %v437
    %621 = vmatpush1.bf16.msra.mxu0 %v436
    %622 = vmatprep.subr.bf16.mxu0 %v429
    %623 = vmatpush1.bf16.msra.mxu0 %v428
    %624 = vmatprep.subr.bf16.mxu0 %v421
    %625 = vmatpush1.bf16.msra.mxu0 %v420
    %626 = vmatprep.subr.bf16.mxu0 %v413
    %627 = vmatpush1.bf16.msra.mxu0 %v412
    %628 = vmatprep.subr.bf16.mxu0 %v405
    %629 = vmatpush1.bf16.msra.mxu0 %v404
    %630 = vmatprep.subr.bf16.mxu0 0
    %631 = vmatpush2.bf16.msra.mxu0 0
    %632 = vmatprep.subr.bf16.mxu0 0
    %633 = vmatpush2.bf16.msra.mxu0 0
    %634 = vmatprep.subr.bf16.mxu0 0
    %635 = vmatpush2.bf16.msra.mxu0 0
    %636 = vmatprep.subr.bf16.mxu0 0
    %637 = vmatpush2.bf16.msra.mxu0 0
    %638 = vmatprep.subr.bf16.mxu0 0
    %639 = vmatpush2.bf16.msra.mxu0 0
    %640 = vmatprep.subr.bf16.mxu0 0
    %641 = vmatpush2.bf16.msra.mxu0 0
    %642 = vmatprep.subr.bf16.mxu0 0
    %643 = vmatpush2.bf16.msra.mxu0 0
    %644 = vmatprep.subr.bf16.mxu0 0
    %645 = vmatpush2.bf16.msra.mxu0 0
    %646 = vmatprep.mubr.bf16.mxu0 0
    %647 = vmatmul.mubr.bf16.gmra.mxu0 %v206
    %v648 = vpop.f32.mrf.mxu0
    %v649 = vadd.f32 %v181, %v648
    %v650 = vpop.f32.mrf.mxu0
    %v651 = vadd.f32 %v185, %v650
    %v652 = vpop.f32.mrf.mxu0
    %v653 = vadd.f32 %v181, %v652
    %v654 = vpop.f32.mrf.mxu0
    %v655 = vadd.f32 %v185, %v654
    %656 = vdwg.mxu0
    %657 = vmatprep.subr.bf16.mxu0 %v463
    %658 = vmatpush1.bf16.msra.mxu0 %v462
    %659 = vmatprep.subr.bf16.mxu0 %v455
    %660 = vmatpush1.bf16.msra.mxu0 %v454
    %661 = vmatprep.subr.bf16.mxu0 %v447
    %662 = vmatpush1.bf16.msra.mxu0 %v446
    %663 = vmatprep.subr.bf16.mxu0 %v439
    %664 = vmatpush1.bf16.msra.mxu0 %v438
    %665 = vmatprep.subr.bf16.mxu0 %v431
    %666 = vmatpush1.bf16.msra.mxu0 %v430
    %667 = vmatprep.subr.bf16.mxu0 %v423
    %668 = vmatpush1.bf16.msra.mxu0 %v422
    %669 = vmatprep.subr.bf16.mxu0 %v415
    %670 = vmatpush1.bf16.msra.mxu0 %v414
    %671 = vmatprep.subr.bf16.mxu0 %v407
    %672 = vmatpush1.bf16.msra.mxu0 %v406
    %673 = vmatprep.subr.bf16.mxu0 0
    %674 = vmatpush2.bf16.msra.mxu0 0
    %675 = vmatprep.subr.bf16.mxu0 0
    %676 = vmatpush2.bf16.msra.mxu0 0
    %677 = vmatprep.subr.bf16.mxu0 0
    %678 = vmatpush2.bf16.msra.mxu0 0
    %679 = vmatprep.subr.bf16.mxu0 0
    %680 = vmatpush2.bf16.msra.mxu0 0
    %681 = vmatprep.subr.bf16.mxu0 0
    %682 = vmatpush2.bf16.msra.mxu0 0
    %683 = vmatprep.subr.bf16.mxu0 0
    %684 = vmatpush2.bf16.msra.mxu0 0
    %685 = vmatprep.subr.bf16.mxu0 0
    %686 = vmatpush2.bf16.msra.mxu0 0
    %687 = vmatprep.subr.bf16.mxu0 0
    %688 = vmatpush2.bf16.msra.mxu0 0
    %689 = vmatprep.mubr.bf16.mxu0 0
    %690 = vmatmul.mubr.bf16.gmra.mxu0 %v206
    %v691 = vpop.f32.mrf.mxu0
    %v692 = vadd.f32 %v189, %v691
    %v693 = vpop.f32.mrf.mxu0
    %v694 = vadd.f32 %v193, %v693
    %v695 = vpop.f32.mrf.mxu0
    %v696 = vadd.f32 %v189, %v695
    %v697 = vpop.f32.mrf.mxu0
    %v698 = vadd.f32 %v193, %v697
    %699 = vdwg.mxu0
    %v700 = vmax.f32 %v563, 0.0
    %v701 = vmax.f32 %v565, 0.0
    %v702 = vmax.f32 %v606, 0.0
    %v703 = vmax.f32 %v608, 0.0
    %v704 = vmax.f32 %v649, 0.0
    %v705 = vmax.f32 %v651, 0.0
    %v706 = vmax.f32 %v692, 0.0
    %v707 = vmax.f32 %v694, 0.0
    %v708 = vmax.f32 %v567, 0.0
    %v709 = vmax.f32 %v569, 0.0
    %v710 = vmax.f32 %v610, 0.0
    %v711 = vmax.f32 %v612, 0.0
    %v712 = vmax.f32 %v653, 0.0
    %v713 = vmax.f32 %v655, 0.0
    %v714 = vmax.f32 %v696, 0.0
    %v715 = vmax.f32 %v698, 0.0
    %v716 = vpack.c.bf16 %v708, %v700
    %v717 = vpack.c.bf16 %v709, %v701
    %v718 = vpack.c.bf16 %v710, %v702
    %v719 = vpack.c.bf16 %v711, %v703
    %v720 = vpack.c.bf16 %v712, %v704
    %v721 = vpack.c.bf16 %v713, %v705
    %v722 = vpack.c.bf16 %v714, %v706
    %v723 = vpack.c.bf16 %v715, %v707
    %v724 = vld [vmem:[#allocation8] sm:$0xff]
    %v725 = vld [vmem:[#allocation8 + $0x8] sm:$0xff]
    %v726 = vld [vmem:[#allocation8 + $0x10] sm:$0xff]
    %v727 = vld [vmem:[#allocation8 + $0x18] sm:$0xff]
    %v728 = vld [vmem:[#allocation8 + $0x20] sm:$0xff]
    %v729 = vld [vmem:[#allocation8 + $0x28] sm:$0xff]
    %v730 = vld [vmem:[#allocation8 + $0x30] sm:$0xff]
    %v731 = vld [vmem:[#allocation8 + $0x38] sm:$0xff]
    %v732 = vld [vmem:[#allocation8 + $0x40] sm:$0xff]
    %v733 = vld [vmem:[#allocation8 + $0x48] sm:$0xff]
    %v734 = vld [vmem:[#allocation8 + $0x50] sm:$0xff]
    %v735 = vld [vmem:[#allocation8 + $0x58] sm:$0xff]
    %v736 = vld [vmem:[#allocation8 + $0x60] sm:$0xff]
    %v737 = vld [vmem:[#allocation8 + $0x68] sm:$0xff]
    %v738 = vld [vmem:[#allocation8 + $0x70] sm:$0xff]
    %v739 = vld [vmem:[#allocation8 + $0x78] sm:$0xff]
    %v740 = vld [vmem:[#allocation8 + $0x80] sm:$0xff]
    %v741 = vld [vmem:[#allocation8 + $0x88] sm:$0xff]
    %v742 = vld [vmem:[#allocation8 + $0x90] sm:$0xff]
    %v743 = vld [vmem:[#allocation8 + $0x98] sm:$0xff]
    %v744 = vld [vmem:[#allocation8 + $0xa0] sm:$0xff]
    %v745 = vld [vmem:[#allocation8 + $0xa8] sm:$0xff]
    %v746 = vld [vmem:[#allocation8 + $0xb0] sm:$0xff]
    %v747 = vld [vmem:[#allocation8 + $0xb8] sm:$0xff]
    %v748 = vld [vmem:[#allocation8 + $0xc0] sm:$0xff]
    %v749 = vld [vmem:[#allocation8 + $0xc8] sm:$0xff]
    %v750 = vld [vmem:[#allocation8 + $0xd0] sm:$0xff]
    %v751 = vld [vmem:[#allocation8 + $0xd8] sm:$0xff]
    %v752 = vld [vmem:[#allocation8 + $0xe0] sm:$0xff]
    %v753 = vld [vmem:[#allocation8 + $0xe8] sm:$0xff]
    %v754 = vld [vmem:[#allocation8 + $0xf0] sm:$0xff]
    %v755 = vld [vmem:[#allocation8 + $0xf8] sm:$0xff]
    %v756 = vld [vmem:[#allocation8 + $0x100] sm:$0xff]
    %v757 = vld [vmem:[#allocation8 + $0x108] sm:$0xff]
    %v758 = vld [vmem:[#allocation8 + $0x110] sm:$0xff]
    %v759 = vld [vmem:[#allocation8 + $0x118] sm:$0xff]
    %v760 = vld [vmem:[#allocation8 + $0x120] sm:$0xff]
    %v761 = vld [vmem:[#allocation8 + $0x128] sm:$0xff]
    %v762 = vld [vmem:[#allocation8 + $0x130] sm:$0xff]
    %v763 = vld [vmem:[#allocation8 + $0x138] sm:$0xff]
    %v764 = vld [vmem:[#allocation8 + $0x140] sm:$0xff]
    %v765 = vld [vmem:[#allocation8 + $0x148] sm:$0xff]
    %v766 = vld [vmem:[#allocation8 + $0x150] sm:$0xff]
    %v767 = vld [vmem:[#allocation8 + $0x158] sm:$0xff]
    %v768 = vld [vmem:[#allocation8 + $0x160] sm:$0xff]
    %v769 = vld [vmem:[#allocation8 + $0x168] sm:$0xff]
    %v770 = vld [vmem:[#allocation8 + $0x170] sm:$0xff]
    %v771 = vld [vmem:[#allocation8 + $0x178] sm:$0xff]
    %v772 = vld [vmem:[#allocation8 + $0x180] sm:$0xff]
    %v773 = vld [vmem:[#allocation8 + $0x188] sm:$0xff]
    %v774 = vld [vmem:[#allocation8 + $0x190] sm:$0xff]
    %v775 = vld [vmem:[#allocation8 + $0x198] sm:$0xff]
    %v776 = vld [vmem:[#allocation8 + $0x1a0] sm:$0xff]
    %v777 = vld [vmem:[#allocation8 + $0x1a8] sm:$0xff]
    %v778 = vld [vmem:[#allocation8 + $0x1b0] sm:$0xff]
    %v779 = vld [vmem:[#allocation8 + $0x1b8] sm:$0xff]
    %v780 = vld [vmem:[#allocation8 + $0x1c0] sm:$0xff]
    %v781 = vld [vmem:[#allocation8 + $0x1c8] sm:$0xff]
    %v782 = vld [vmem:[#allocation8 + $0x1d0] sm:$0xff]
    %v783 = vld [vmem:[#allocation8 + $0x1d8] sm:$0xff]
    %v784 = vld [vmem:[#allocation8 + $0x1e0] sm:$0xff]
    %v785 = vld [vmem:[#allocation8 + $0x1e8] sm:$0xff]
    %v786 = vld [vmem:[#allocation8 + $0x1f0] sm:$0xff]
    %v787 = vld [vmem:[#allocation8 + $0x1f8] sm:$0xff]
    %v788 = vld [vmem:[#allocation8 + $0x200] sm:$0xff]
    %v789 = vld [vmem:[#allocation8 + $0x208] sm:$0xff]
    %v790 = vld [vmem:[#allocation8 + $0x210] sm:$0xff]
    %v791 = vld [vmem:[#allocation8 + $0x218] sm:$0xff]
    %v792 = vld [vmem:[#allocation8 + $0x220] sm:$0xff]
    %v793 = vld [vmem:[#allocation8 + $0x228] sm:$0xff]
    %v794 = vld [vmem:[#allocation8 + $0x230] sm:$0xff]
    %v795 = vld [vmem:[#allocation8 + $0x238] sm:$0xff]
    %v796 = vld [vmem:[#allocation8 + $0x240] sm:$0xff]
    %v797 = vld [vmem:[#allocation8 + $0x248] sm:$0xff]
    %v798 = vld [vmem:[#allocation8 + $0x250] sm:$0xff]
    %v799 = vld [vmem:[#allocation8 + $0x258] sm:$0xff]
    %v800 = vld [vmem:[#allocation8 + $0x260] sm:$0xff]
    %v801 = vld [vmem:[#allocation8 + $0x268] sm:$0xff]
    %v802 = vld [vmem:[#allocation8 + $0x270] sm:$0xff]
    %v803 = vld [vmem:[#allocation8 + $0x278] sm:$0xff]
    %v804 = vld [vmem:[#allocation8 + $0x280] sm:$0xff]
    %v805 = vld [vmem:[#allocation8 + $0x288] sm:$0xff]
    %v806 = vld [vmem:[#allocation8 + $0x290] sm:$0xff]
    %v807 = vld [vmem:[#allocation8 + $0x298] sm:$0xff]
    %v808 = vld [vmem:[#allocation8 + $0x2a0] sm:$0xff]
    %v809 = vld [vmem:[#allocation8 + $0x2a8] sm:$0xff]
    %v810 = vld [vmem:[#allocation8 + $0x2b0] sm:$0xff]
    %v811 = vld [vmem:[#allocation8 + $0x2b8] sm:$0xff]
    %v812 = vld [vmem:[#allocation8 + $0x2c0] sm:$0xff]
    %v813 = vld [vmem:[#allocation8 + $0x2c8] sm:$0xff]
    %v814 = vld [vmem:[#allocation8 + $0x2d0] sm:$0xff]
    %v815 = vld [vmem:[#allocation8 + $0x2d8] sm:$0xff]
    %v816 = vld [vmem:[#allocation8 + $0x2e0] sm:$0xff]
    %v817 = vld [vmem:[#allocation8 + $0x2e8] sm:$0xff]
    %v818 = vld [vmem:[#allocation8 + $0x2f0] sm:$0xff]
    %v819 = vld [vmem:[#allocation8 + $0x2f8] sm:$0xff]
    %v820 = vld [vmem:[#allocation8 + $0x300] sm:$0xff]
    %v821 = vld [vmem:[#allocation8 + $0x308] sm:$0xff]
    %v822 = vld [vmem:[#allocation8 + $0x310] sm:$0xff]
    %v823 = vld [vmem:[#allocation8 + $0x318] sm:$0xff]
    %v824 = vld [vmem:[#allocation8 + $0x320] sm:$0xff]
    %v825 = vld [vmem:[#allocation8 + $0x328] sm:$0xff]
    %v826 = vld [vmem:[#allocation8 + $0x330] sm:$0xff]
    %v827 = vld [vmem:[#allocation8 + $0x338] sm:$0xff]
    %v828 = vld [vmem:[#allocation8 + $0x340] sm:$0xff]
    %v829 = vld [vmem:[#allocation8 + $0x348] sm:$0xff]
    %v830 = vld [vmem:[#allocation8 + $0x350] sm:$0xff]
    %v831 = vld [vmem:[#allocation8 + $0x358] sm:$0xff]
    %v832 = vld [vmem:[#allocation8 + $0x360] sm:$0xff]
    %v833 = vld [vmem:[#allocation8 + $0x368] sm:$0xff]
    %v834 = vld [vmem:[#allocation8 + $0x370] sm:$0xff]
    %v835 = vld [vmem:[#allocation8 + $0x378] sm:$0xff]
    %v836 = vld [vmem:[#allocation8 + $0x380] sm:$0xff]
    %v837 = vld [vmem:[#allocation8 + $0x388] sm:$0xff]
    %v838 = vld [vmem:[#allocation8 + $0x390] sm:$0xff]
    %v839 = vld [vmem:[#allocation8 + $0x398] sm:$0xff]
    %v840 = vld [vmem:[#allocation8 + $0x3a0] sm:$0xff]
    %v841 = vld [vmem:[#allocation8 + $0x3a8] sm:$0xff]
    %v842 = vld [vmem:[#allocation8 + $0x3b0] sm:$0xff]
    %v843 = vld [vmem:[#allocation8 + $0x3b8] sm:$0xff]
    %v844 = vld [vmem:[#allocation8 + $0x3c0] sm:$0xff]
    %v845 = vld [vmem:[#allocation8 + $0x3c8] sm:$0xff]
    %v846 = vld [vmem:[#allocation8 + $0x3d0] sm:$0xff]
    %v847 = vld [vmem:[#allocation8 + $0x3d8] sm:$0xff]
    %v848 = vld [vmem:[#allocation8 + $0x3e0] sm:$0xff]
    %v849 = vld [vmem:[#allocation8 + $0x3e8] sm:$0xff]
    %v850 = vld [vmem:[#allocation8 + $0x3f0] sm:$0xff]
    %v851 = vld [vmem:[#allocation8 + $0x3f8] sm:$0xff]
    %v852 = vld [vmem:[#allocation8 + $0x400] sm:$0xff]
    %v853 = vld [vmem:[#allocation8 + $0x408] sm:$0xff]
    %v854 = vld [vmem:[#allocation8 + $0x410] sm:$0xff]
    %v855 = vld [vmem:[#allocation8 + $0x418] sm:$0xff]
    %v856 = vld [vmem:[#allocation8 + $0x420] sm:$0xff]
    %v857 = vld [vmem:[#allocation8 + $0x428] sm:$0xff]
    %v858 = vld [vmem:[#allocation8 + $0x430] sm:$0xff]
    %v859 = vld [vmem:[#allocation8 + $0x438] sm:$0xff]
    %v860 = vld [vmem:[#allocation8 + $0x440] sm:$0xff]
    %v861 = vld [vmem:[#allocation8 + $0x448] sm:$0xff]
    %v862 = vld [vmem:[#allocation8 + $0x450] sm:$0xff]
    %v863 = vld [vmem:[#allocation8 + $0x458] sm:$0xff]
    %v864 = vld [vmem:[#allocation8 + $0x460] sm:$0xff]
    %v865 = vld [vmem:[#allocation8 + $0x468] sm:$0xff]
    %v866 = vld [vmem:[#allocation8 + $0x470] sm:$0xff]
    %v867 = vld [vmem:[#allocation8 + $0x478] sm:$0xff]
    %v868 = vld [vmem:[#allocation8 + $0x480] sm:$0xff]
    %v869 = vld [vmem:[#allocation8 + $0x488] sm:$0xff]
    %v870 = vld [vmem:[#allocation8 + $0x490] sm:$0xff]
    %v871 = vld [vmem:[#allocation8 + $0x498] sm:$0xff]
    %v872 = vld [vmem:[#allocation8 + $0x4a0] sm:$0xff]
    %v873 = vld [vmem:[#allocation8 + $0x4a8] sm:$0xff]
    %v874 = vld [vmem:[#allocation8 + $0x4b0] sm:$0xff]
    %v875 = vld [vmem:[#allocation8 + $0x4b8] sm:$0xff]
    %v876 = vld [vmem:[#allocation8 + $0x4c0] sm:$0xff]
    %v877 = vld [vmem:[#allocation8 + $0x4c8] sm:$0xff]
    %v878 = vld [vmem:[#allocation8 + $0x4d0] sm:$0xff]
    %v879 = vld [vmem:[#allocation8 + $0x4d8] sm:$0xff]
    %v880 = vld [vmem:[#allocation8 + $0x4e0] sm:$0xff]
    %v881 = vld [vmem:[#allocation8 + $0x4e8] sm:$0xff]
    %v882 = vld [vmem:[#allocation8 + $0x4f0] sm:$0xff]
    %v883 = vld [vmem:[#allocation8 + $0x4f8] sm:$0xff]
    %v884 = vld [vmem:[#allocation8 + $0x500] sm:$0xff]
    %v885 = vld [vmem:[#allocation8 + $0x508] sm:$0xff]
    %v886 = vld [vmem:[#allocation8 + $0x510] sm:$0xff]
    %v887 = vld [vmem:[#allocation8 + $0x518] sm:$0xff]
    %v888 = vld [vmem:[#allocation8 + $0x520] sm:$0xff]
    %v889 = vld [vmem:[#allocation8 + $0x528] sm:$0xff]
    %v890 = vld [vmem:[#allocation8 + $0x530] sm:$0xff]
    %v891 = vld [vmem:[#allocation8 + $0x538] sm:$0xff]
    %v892 = vld [vmem:[#allocation8 + $0x540] sm:$0xff]
    %v893 = vld [vmem:[#allocation8 + $0x548] sm:$0xff]
    %v894 = vld [vmem:[#allocation8 + $0x550] sm:$0xff]
    %v895 = vld [vmem:[#allocation8 + $0x558] sm:$0xff]
    %v896 = vld [vmem:[#allocation8 + $0x560] sm:$0xff]
    %v897 = vld [vmem:[#allocation8 + $0x568] sm:$0xff]
    %v898 = vld [vmem:[#allocation8 + $0x570] sm:$0xff]
    %v899 = vld [vmem:[#allocation8 + $0x578] sm:$0xff]
    %v900 = vld [vmem:[#allocation8 + $0x580] sm:$0xff]
    %v901 = vld [vmem:[#allocation8 + $0x588] sm:$0xff]
    %v902 = vld [vmem:[#allocation8 + $0x590] sm:$0xff]
    %v903 = vld [vmem:[#allocation8 + $0x598] sm:$0xff]
    %v904 = vld [vmem:[#allocation8 + $0x5a0] sm:$0xff]
    %v905 = vld [vmem:[#allocation8 + $0x5a8] sm:$0xff]
    %v906 = vld [vmem:[#allocation8 + $0x5b0] sm:$0xff]
    %v907 = vld [vmem:[#allocation8 + $0x5b8] sm:$0xff]
    %v908 = vld [vmem:[#allocation8 + $0x5c0] sm:$0xff]
    %v909 = vld [vmem:[#allocation8 + $0x5c8] sm:$0xff]
    %v910 = vld [vmem:[#allocation8 + $0x5d0] sm:$0xff]
    %v911 = vld [vmem:[#allocation8 + $0x5d8] sm:$0xff]
    %v912 = vld [vmem:[#allocation8 + $0x5e0] sm:$0xff]
    %v913 = vld [vmem:[#allocation8 + $0x5e8] sm:$0xff]
    %v914 = vld [vmem:[#allocation8 + $0x5f0] sm:$0xff]
    %v915 = vld [vmem:[#allocation8 + $0x5f8] sm:$0xff]
    %v916 = vld [vmem:[#allocation8 + $0x600] sm:$0xff]
    %v917 = vld [vmem:[#allocation8 + $0x608] sm:$0xff]
    %v918 = vld [vmem:[#allocation8 + $0x610] sm:$0xff]
    %v919 = vld [vmem:[#allocation8 + $0x618] sm:$0xff]
    %v920 = vld [vmem:[#allocation8 + $0x620] sm:$0xff]
    %v921 = vld [vmem:[#allocation8 + $0x628] sm:$0xff]
    %v922 = vld [vmem:[#allocation8 + $0x630] sm:$0xff]
    %v923 = vld [vmem:[#allocation8 + $0x638] sm:$0xff]
    %v924 = vld [vmem:[#allocation8 + $0x640] sm:$0xff]
    %v925 = vld [vmem:[#allocation8 + $0x648] sm:$0xff]
    %v926 = vld [vmem:[#allocation8 + $0x650] sm:$0xff]
    %v927 = vld [vmem:[#allocation8 + $0x658] sm:$0xff]
    %v928 = vld [vmem:[#allocation8 + $0x660] sm:$0xff]
    %v929 = vld [vmem:[#allocation8 + $0x668] sm:$0xff]
    %v930 = vld [vmem:[#allocation8 + $0x670] sm:$0xff]
    %v931 = vld [vmem:[#allocation8 + $0x678] sm:$0xff]
    %v932 = vld [vmem:[#allocation8 + $0x680] sm:$0xff]
    %v933 = vld [vmem:[#allocation8 + $0x688] sm:$0xff]
    %v934 = vld [vmem:[#allocation8 + $0x690] sm:$0xff]
    %v935 = vld [vmem:[#allocation8 + $0x698] sm:$0xff]
    %v936 = vld [vmem:[#allocation8 + $0x6a0] sm:$0xff]
    %v937 = vld [vmem:[#allocation8 + $0x6a8] sm:$0xff]
    %v938 = vld [vmem:[#allocation8 + $0x6b0] sm:$0xff]
    %v939 = vld [vmem:[#allocation8 + $0x6b8] sm:$0xff]
    %v940 = vld [vmem:[#allocation8 + $0x6c0] sm:$0xff]
    %v941 = vld [vmem:[#allocation8 + $0x6c8] sm:$0xff]
    %v942 = vld [vmem:[#allocation8 + $0x6d0] sm:$0xff]
    %v943 = vld [vmem:[#allocation8 + $0x6d8] sm:$0xff]
    %v944 = vld [vmem:[#allocation8 + $0x6e0] sm:$0xff]
    %v945 = vld [vmem:[#allocation8 + $0x6e8] sm:$0xff]
    %v946 = vld [vmem:[#allocation8 + $0x6f0] sm:$0xff]
    %v947 = vld [vmem:[#allocation8 + $0x6f8] sm:$0xff]
    %v948 = vld [vmem:[#allocation8 + $0x700] sm:$0xff]
    %v949 = vld [vmem:[#allocation8 + $0x708] sm:$0xff]
    %v950 = vld [vmem:[#allocation8 + $0x710] sm:$0xff]
    %v951 = vld [vmem:[#allocation8 + $0x718] sm:$0xff]
    %v952 = vld [vmem:[#allocation8 + $0x720] sm:$0xff]
    %v953 = vld [vmem:[#allocation8 + $0x728] sm:$0xff]
    %v954 = vld [vmem:[#allocation8 + $0x730] sm:$0xff]
    %v955 = vld [vmem:[#allocation8 + $0x738] sm:$0xff]
    %v956 = vld [vmem:[#allocation8 + $0x740] sm:$0xff]
    %v957 = vld [vmem:[#allocation8 + $0x748] sm:$0xff]
    %v958 = vld [vmem:[#allocation8 + $0x750] sm:$0xff]
    %v959 = vld [vmem:[#allocation8 + $0x758] sm:$0xff]
    %v960 = vld [vmem:[#allocation8 + $0x760] sm:$0xff]
    %v961 = vld [vmem:[#allocation8 + $0x768] sm:$0xff]
    %v962 = vld [vmem:[#allocation8 + $0x770] sm:$0xff]
    %v963 = vld [vmem:[#allocation8 + $0x778] sm:$0xff]
    %v964 = vld [vmem:[#allocation8 + $0x780] sm:$0xff]
    %v965 = vld [vmem:[#allocation8 + $0x788] sm:$0xff]
    %v966 = vld [vmem:[#allocation8 + $0x790] sm:$0xff]
    %v967 = vld [vmem:[#allocation8 + $0x798] sm:$0xff]
    %v968 = vld [vmem:[#allocation8 + $0x7a0] sm:$0xff]
    %v969 = vld [vmem:[#allocation8 + $0x7a8] sm:$0xff]
    %v970 = vld [vmem:[#allocation8 + $0x7b0] sm:$0xff]
    %v971 = vld [vmem:[#allocation8 + $0x7b8] sm:$0xff]
    %v972 = vld [vmem:[#allocation8 + $0x7c0] sm:$0xff]
    %v973 = vld [vmem:[#allocation8 + $0x7c8] sm:$0xff]
    %v974 = vld [vmem:[#allocation8 + $0x7d0] sm:$0xff]
    %v975 = vld [vmem:[#allocation8 + $0x7d8] sm:$0xff]
    %v976 = vld [vmem:[#allocation8 + $0x7e0] sm:$0xff]
    %v977 = vld [vmem:[#allocation8 + $0x7e8] sm:$0xff]
    %v978 = vld [vmem:[#allocation8 + $0x7f0] sm:$0xff]
    %v979 = vld [vmem:[#allocation8 + $0x7f8] sm:$0xff]
    %v980 = vld [vmem:[%s4] sm:$0xf]
    %v982 = vlaneseq
    %v983 = vshrl.u32 %v982, 7
    %v984 = vsub.s32 0, %v983
    %v985 = vrot.slane %v980, %v984
    %v986 = vlaneseq
    %v987 = vshrl.u32 %v986, 7
    %v988 = vsub.s32 1, %v987
    %v989 = vrot.slane %v980, %v988
    %v990 = vlaneseq
    %v991 = vshrl.u32 %v990, 7
    %v992 = vsub.s32 2, %v991
    %v993 = vrot.slane %v980, %v992
    %v994 = vlaneseq
    %v995 = vshrl.u32 %v994, 7
    %v996 = vsub.s32 3, %v995
    %v997 = vrot.slane %v980, %v996
    %v1258 = vunpack.c.l.b16 %v724
    %v1259 = vunpack.c.h.b16 %v724
    %v1260 = vunpack.c.l.b16 %v725
    %v1261 = vunpack.c.h.b16 %v725
    %v1262 = vunpack.c.l.b16 %v726
    %v1263 = vunpack.c.h.b16 %v726
    %v1264 = vunpack.c.l.b16 %v727
    %v1265 = vunpack.c.h.b16 %v727
    %v1266 = vunpack.c.l.b16 %v728
    %v1267 = vunpack.c.h.b16 %v728
    %v1268 = vunpack.c.l.b16 %v729
    %v1269 = vunpack.c.h.b16 %v729
    %v1270 = vunpack.c.l.b16 %v730
    %v1271 = vunpack.c.h.b16 %v730
    %v1272 = vunpack.c.l.b16 %v731
    %v1273 = vunpack.c.h.b16 %v731
    %v1274 = vunpack.c.l.b16 %v732
    %v1275 = vunpack.c.h.b16 %v732
    %v1276 = vunpack.c.l.b16 %v733
    %v1277 = vunpack.c.h.b16 %v733
    %v1278 = vunpack.c.l.b16 %v734
    %v1279 = vunpack.c.h.b16 %v734
    %v1280 = vunpack.c.l.b16 %v735
    %v1281 = vunpack.c.h.b16 %v735
    %v1282 = vunpack.c.l.b16 %v736
    %v1283 = vunpack.c.h.b16 %v736
    %v1284 = vunpack.c.l.b16 %v737
    %v1285 = vunpack.c.h.b16 %v737
    %v1286 = vunpack.c.l.b16 %v738
    %v1287 = vunpack.c.h.b16 %v738
    %v1288 = vunpack.c.l.b16 %v739
    %v1289 = vunpack.c.h.b16 %v739
    %v1290 = vunpack.c.l.b16 %v740
    %v1291 = vunpack.c.h.b16 %v740
    %v1292 = vunpack.c.l.b16 %v741
    %v1293 = vunpack.c.h.b16 %v741
    %v1294 = vunpack.c.l.b16 %v742
    %v1295 = vunpack.c.h.b16 %v742
    %v1296 = vunpack.c.l.b16 %v743
    %v1297 = vunpack.c.h.b16 %v743
    %v1298 = vunpack.c.l.b16 %v744
    %v1299 = vunpack.c.h.b16 %v744
    %v1300 = vunpack.c.l.b16 %v745
    %v1301 = vunpack.c.h.b16 %v745
    %v1302 = vunpack.c.l.b16 %v746
    %v1303 = vunpack.c.h.b16 %v746
    %v1304 = vunpack.c.l.b16 %v747
    %v1305 = vunpack.c.h.b16 %v747
    %v1306 = vunpack.c.l.b16 %v748
    %v1307 = vunpack.c.h.b16 %v748
    %v1308 = vunpack.c.l.b16 %v749
    %v1309 = vunpack.c.h.b16 %v749
    %v1310 = vunpack.c.l.b16 %v750
    %v1311 = vunpack.c.h.b16 %v750
    %v1312 = vunpack.c.l.b16 %v751
    %v1313 = vunpack.c.h.b16 %v751
    %v1314 = vunpack.c.l.b16 %v752
    %v1315 = vunpack.c.h.b16 %v752
    %v1316 = vunpack.c.l.b16 %v753
    %v1317 = vunpack.c.h.b16 %v753
    %v1318 = vunpack.c.l.b16 %v754
    %v1319 = vunpack.c.h.b16 %v754
    %v1320 = vunpack.c.l.b16 %v755
    %v1321 = vunpack.c.h.b16 %v755
    %v1322 = vunpack.c.l.b16 %v756
    %v1323 = vunpack.c.h.b16 %v756
    %v1324 = vunpack.c.l.b16 %v757
    %v1325 = vunpack.c.h.b16 %v757
    %v1326 = vunpack.c.l.b16 %v758
    %v1327 = vunpack.c.h.b16 %v758
    %v1328 = vunpack.c.l.b16 %v759
    %v1329 = vunpack.c.h.b16 %v759
    %v1330 = vunpack.c.l.b16 %v760
    %v1331 = vunpack.c.h.b16 %v760
    %v1332 = vunpack.c.l.b16 %v761
    %v1333 = vunpack.c.h.b16 %v761
    %v1334 = vunpack.c.l.b16 %v762
    %v1335 = vunpack.c.h.b16 %v762
    %v1336 = vunpack.c.l.b16 %v763
    %v1337 = vunpack.c.h.b16 %v763
    %v1338 = vunpack.c.l.b16 %v764
    %v1339 = vunpack.c.h.b16 %v764
    %v1340 = vunpack.c.l.b16 %v765
    %v1341 = vunpack.c.h.b16 %v765
    %v1342 = vunpack.c.l.b16 %v766
    %v1343 = vunpack.c.h.b16 %v766
    %v1344 = vunpack.c.l.b16 %v767
    %v1345 = vunpack.c.h.b16 %v767
    %v1346 = vunpack.c.l.b16 %v768
    %v1347 = vunpack.c.h.b16 %v768
    %v1348 = vunpack.c.l.b16 %v769
    %v1349 = vunpack.c.h.b16 %v769
    %v1350 = vunpack.c.l.b16 %v770
    %v1351 = vunpack.c.h.b16 %v770
    %v1352 = vunpack.c.l.b16 %v771
    %v1353 = vunpack.c.h.b16 %v771
    %v1354 = vunpack.c.l.b16 %v772
    %v1355 = vunpack.c.h.b16 %v772
    %v1356 = vunpack.c.l.b16 %v773
    %v1357 = vunpack.c.h.b16 %v773
    %v1358 = vunpack.c.l.b16 %v774
    %v1359 = vunpack.c.h.b16 %v774
    %v1360 = vunpack.c.l.b16 %v775
    %v1361 = vunpack.c.h.b16 %v775
    %v1362 = vunpack.c.l.b16 %v776
    %v1363 = vunpack.c.h.b16 %v776
    %v1364 = vunpack.c.l.b16 %v777
    %v1365 = vunpack.c.h.b16 %v777
    %v1366 = vunpack.c.l.b16 %v778
    %v1367 = vunpack.c.h.b16 %v778
    %v1368 = vunpack.c.l.b16 %v779
    %v1369 = vunpack.c.h.b16 %v779
    %v1370 = vunpack.c.l.b16 %v780
    %v1371 = vunpack.c.h.b16 %v780
    %v1372 = vunpack.c.l.b16 %v781
    %v1373 = vunpack.c.h.b16 %v781
    %v1374 = vunpack.c.l.b16 %v782
    %v1375 = vunpack.c.h.b16 %v782
    %v1376 = vunpack.c.l.b16 %v783
    %v1377 = vunpack.c.h.b16 %v783
    %v1378 = vunpack.c.l.b16 %v784
    %v1379 = vunpack.c.h.b16 %v784
    %v1380 = vunpack.c.l.b16 %v785
    %v1381 = vunpack.c.h.b16 %v785
    %v1382 = vunpack.c.l.b16 %v786
    %v1383 = vunpack.c.h.b16 %v786
    %v1384 = vunpack.c.l.b16 %v787
    %v1385 = vunpack.c.h.b16 %v787
    %v1386 = vunpack.c.l.b16 %v788
    %v1387 = vunpack.c.h.b16 %v788
    %v1388 = vunpack.c.l.b16 %v789
    %v1389 = vunpack.c.h.b16 %v789
    %v1390 = vunpack.c.l.b16 %v790
    %v1391 = vunpack.c.h.b16 %v790
    %v1392 = vunpack.c.l.b16 %v791
    %v1393 = vunpack.c.h.b16 %v791
    %v1394 = vunpack.c.l.b16 %v792
    %v1395 = vunpack.c.h.b16 %v792
    %v1396 = vunpack.c.l.b16 %v793
    %v1397 = vunpack.c.h.b16 %v793
    %v1398 = vunpack.c.l.b16 %v794
    %v1399 = vunpack.c.h.b16 %v794
    %v1400 = vunpack.c.l.b16 %v795
    %v1401 = vunpack.c.h.b16 %v795
    %v1402 = vunpack.c.l.b16 %v796
    %v1403 = vunpack.c.h.b16 %v796
    %v1404 = vunpack.c.l.b16 %v797
    %v1405 = vunpack.c.h.b16 %v797
    %v1406 = vunpack.c.l.b16 %v798
    %v1407 = vunpack.c.h.b16 %v798
    %v1408 = vunpack.c.l.b16 %v799
    %v1409 = vunpack.c.h.b16 %v799
    %v1410 = vunpack.c.l.b16 %v800
    %v1411 = vunpack.c.h.b16 %v800
    %v1412 = vunpack.c.l.b16 %v801
    %v1413 = vunpack.c.h.b16 %v801
    %v1414 = vunpack.c.l.b16 %v802
    %v1415 = vunpack.c.h.b16 %v802
    %v1416 = vunpack.c.l.b16 %v803
    %v1417 = vunpack.c.h.b16 %v803
    %v1418 = vunpack.c.l.b16 %v804
    %v1419 = vunpack.c.h.b16 %v804
    %v1420 = vunpack.c.l.b16 %v805
    %v1421 = vunpack.c.h.b16 %v805
    %v1422 = vunpack.c.l.b16 %v806
    %v1423 = vunpack.c.h.b16 %v806
    %v1424 = vunpack.c.l.b16 %v807
    %v1425 = vunpack.c.h.b16 %v807
    %v1426 = vunpack.c.l.b16 %v808
    %v1427 = vunpack.c.h.b16 %v808
    %v1428 = vunpack.c.l.b16 %v809
    %v1429 = vunpack.c.h.b16 %v809
    %v1430 = vunpack.c.l.b16 %v810
    %v1431 = vunpack.c.h.b16 %v810
    %v1432 = vunpack.c.l.b16 %v811
    %v1433 = vunpack.c.h.b16 %v811
    %v1434 = vunpack.c.l.b16 %v812
    %v1435 = vunpack.c.h.b16 %v812
    %v1436 = vunpack.c.l.b16 %v813
    %v1437 = vunpack.c.h.b16 %v813
    %v1438 = vunpack.c.l.b16 %v814
    %v1439 = vunpack.c.h.b16 %v814
    %v1440 = vunpack.c.l.b16 %v815
    %v1441 = vunpack.c.h.b16 %v815
    %v1442 = vunpack.c.l.b16 %v816
    %v1443 = vunpack.c.h.b16 %v816
    %v1444 = vunpack.c.l.b16 %v817
    %v1445 = vunpack.c.h.b16 %v817
    %v1446 = vunpack.c.l.b16 %v818
    %v1447 = vunpack.c.h.b16 %v818
    %v1448 = vunpack.c.l.b16 %v819
    %v1449 = vunpack.c.h.b16 %v819
    %v1450 = vunpack.c.l.b16 %v820
    %v1451 = vunpack.c.h.b16 %v820
    %v1452 = vunpack.c.l.b16 %v821
    %v1453 = vunpack.c.h.b16 %v821
    %v1454 = vunpack.c.l.b16 %v822
    %v1455 = vunpack.c.h.b16 %v822
    %v1456 = vunpack.c.l.b16 %v823
    %v1457 = vunpack.c.h.b16 %v823
    %v1458 = vunpack.c.l.b16 %v824
    %v1459 = vunpack.c.h.b16 %v824
    %v1460 = vunpack.c.l.b16 %v825
    %v1461 = vunpack.c.h.b16 %v825
    %v1462 = vunpack.c.l.b16 %v826
    %v1463 = vunpack.c.h.b16 %v826
    %v1464 = vunpack.c.l.b16 %v827
    %v1465 = vunpack.c.h.b16 %v827
    %v1466 = vunpack.c.l.b16 %v828
    %v1467 = vunpack.c.h.b16 %v828
    %v1468 = vunpack.c.l.b16 %v829
    %v1469 = vunpack.c.h.b16 %v829
    %v1470 = vunpack.c.l.b16 %v830
    %v1471 = vunpack.c.h.b16 %v830
    %v1472 = vunpack.c.l.b16 %v831
    %v1473 = vunpack.c.h.b16 %v831
    %v1474 = vunpack.c.l.b16 %v832
    %v1475 = vunpack.c.h.b16 %v832
    %v1476 = vunpack.c.l.b16 %v833
    %v1477 = vunpack.c.h.b16 %v833
    %v1478 = vunpack.c.l.b16 %v834
    %v1479 = vunpack.c.h.b16 %v834
    %v1480 = vunpack.c.l.b16 %v835
    %v1481 = vunpack.c.h.b16 %v835
    %v1482 = vunpack.c.l.b16 %v836
    %v1483 = vunpack.c.h.b16 %v836
    %v1484 = vunpack.c.l.b16 %v837
    %v1485 = vunpack.c.h.b16 %v837
    %v1486 = vunpack.c.l.b16 %v838
    %v1487 = vunpack.c.h.b16 %v838
    %v1488 = vunpack.c.l.b16 %v839
    %v1489 = vunpack.c.h.b16 %v839
    %v1490 = vunpack.c.l.b16 %v840
    %v1491 = vunpack.c.h.b16 %v840
    %v1492 = vunpack.c.l.b16 %v841
    %v1493 = vunpack.c.h.b16 %v841
    %v1494 = vunpack.c.l.b16 %v842
    %v1495 = vunpack.c.h.b16 %v842
    %v1496 = vunpack.c.l.b16 %v843
    %v1497 = vunpack.c.h.b16 %v843
    %v1498 = vunpack.c.l.b16 %v844
    %v1499 = vunpack.c.h.b16 %v844
    %v1500 = vunpack.c.l.b16 %v845
    %v1501 = vunpack.c.h.b16 %v845
    %v1502 = vunpack.c.l.b16 %v846
    %v1503 = vunpack.c.h.b16 %v846
    %v1504 = vunpack.c.l.b16 %v847
    %v1505 = vunpack.c.h.b16 %v847
    %v1506 = vunpack.c.l.b16 %v848
    %v1507 = vunpack.c.h.b16 %v848
    %v1508 = vunpack.c.l.b16 %v849
    %v1509 = vunpack.c.h.b16 %v849
    %v1510 = vunpack.c.l.b16 %v850
    %v1511 = vunpack.c.h.b16 %v850
    %v1512 = vunpack.c.l.b16 %v851
    %v1513 = vunpack.c.h.b16 %v851
    %v1514 = vunpack.c.l.b16 %v852
    %v1515 = vunpack.c.h.b16 %v852
    %v1516 = vunpack.c.l.b16 %v853
    %v1517 = vunpack.c.h.b16 %v853
    %v1518 = vunpack.c.l.b16 %v854
    %v1519 = vunpack.c.h.b16 %v854
    %v1520 = vunpack.c.l.b16 %v855
    %v1521 = vunpack.c.h.b16 %v855
    %v1522 = vunpack.c.l.b16 %v856
    %v1523 = vunpack.c.h.b16 %v856
    %v1524 = vunpack.c.l.b16 %v857
    %v1525 = vunpack.c.h.b16 %v857
    %v1526 = vunpack.c.l.b16 %v858
    %v1527 = vunpack.c.h.b16 %v858
    %v1528 = vunpack.c.l.b16 %v859
    %v1529 = vunpack.c.h.b16 %v859
    %v1530 = vunpack.c.l.b16 %v860
    %v1531 = vunpack.c.h.b16 %v860
    %v1532 = vunpack.c.l.b16 %v861
    %v1533 = vunpack.c.h.b16 %v861
    %v1534 = vunpack.c.l.b16 %v862
    %v1535 = vunpack.c.h.b16 %v862
    %v1536 = vunpack.c.l.b16 %v863
    %v1537 = vunpack.c.h.b16 %v863
    %v1538 = vunpack.c.l.b16 %v864
    %v1539 = vunpack.c.h.b16 %v864
    %v1540 = vunpack.c.l.b16 %v865
    %v1541 = vunpack.c.h.b16 %v865
    %v1542 = vunpack.c.l.b16 %v866
    %v1543 = vunpack.c.h.b16 %v866
    %v1544 = vunpack.c.l.b16 %v867
    %v1545 = vunpack.c.h.b16 %v867
    %v1546 = vunpack.c.l.b16 %v868
    %v1547 = vunpack.c.h.b16 %v868
    %v1548 = vunpack.c.l.b16 %v869
    %v1549 = vunpack.c.h.b16 %v869
    %v1550 = vunpack.c.l.b16 %v870
    %v1551 = vunpack.c.h.b16 %v870
    %v1552 = vunpack.c.l.b16 %v871
    %v1553 = vunpack.c.h.b16 %v871
    %v1554 = vunpack.c.l.b16 %v872
    %v1555 = vunpack.c.h.b16 %v872
    %v1556 = vunpack.c.l.b16 %v873
    %v1557 = vunpack.c.h.b16 %v873
    %v1558 = vunpack.c.l.b16 %v874
    %v1559 = vunpack.c.h.b16 %v874
    %v1560 = vunpack.c.l.b16 %v875
    %v1561 = vunpack.c.h.b16 %v875
    %v1562 = vunpack.c.l.b16 %v876
    %v1563 = vunpack.c.h.b16 %v876
    %v1564 = vunpack.c.l.b16 %v877
    %v1565 = vunpack.c.h.b16 %v877
    %v1566 = vunpack.c.l.b16 %v878
    %v1567 = vunpack.c.h.b16 %v878
    %v1568 = vunpack.c.l.b16 %v879
    %v1569 = vunpack.c.h.b16 %v879
    %v1570 = vunpack.c.l.b16 %v880
    %v1571 = vunpack.c.h.b16 %v880
    %v1572 = vunpack.c.l.b16 %v881
    %v1573 = vunpack.c.h.b16 %v881
    %v1574 = vunpack.c.l.b16 %v882
    %v1575 = vunpack.c.h.b16 %v882
    %v1576 = vunpack.c.l.b16 %v883
    %v1577 = vunpack.c.h.b16 %v883
    %v1578 = vunpack.c.l.b16 %v884
    %v1579 = vunpack.c.h.b16 %v884
    %v1580 = vunpack.c.l.b16 %v885
    %v1581 = vunpack.c.h.b16 %v885
    %v1582 = vunpack.c.l.b16 %v886
    %v1583 = vunpack.c.h.b16 %v886
    %v1584 = vunpack.c.l.b16 %v887
    %v1585 = vunpack.c.h.b16 %v887
    %v1586 = vunpack.c.l.b16 %v888
    %v1587 = vunpack.c.h.b16 %v888
    %v1588 = vunpack.c.l.b16 %v889
    %v1589 = vunpack.c.h.b16 %v889
    %v1590 = vunpack.c.l.b16 %v890
    %v1591 = vunpack.c.h.b16 %v890
    %v1592 = vunpack.c.l.b16 %v891
    %v1593 = vunpack.c.h.b16 %v891
    %v1594 = vunpack.c.l.b16 %v892
    %v1595 = vunpack.c.h.b16 %v892
    %v1596 = vunpack.c.l.b16 %v893
    %v1597 = vunpack.c.h.b16 %v893
    %v1598 = vunpack.c.l.b16 %v894
    %v1599 = vunpack.c.h.b16 %v894
    %v1600 = vunpack.c.l.b16 %v895
    %v1601 = vunpack.c.h.b16 %v895
    %v1602 = vunpack.c.l.b16 %v896
    %v1603 = vunpack.c.h.b16 %v896
    %v1604 = vunpack.c.l.b16 %v897
    %v1605 = vunpack.c.h.b16 %v897
    %v1606 = vunpack.c.l.b16 %v898
    %v1607 = vunpack.c.h.b16 %v898
    %v1608 = vunpack.c.l.b16 %v899
    %v1609 = vunpack.c.h.b16 %v899
    %v1610 = vunpack.c.l.b16 %v900
    %v1611 = vunpack.c.h.b16 %v900
    %v1612 = vunpack.c.l.b16 %v901
    %v1613 = vunpack.c.h.b16 %v901
    %v1614 = vunpack.c.l.b16 %v902
    %v1615 = vunpack.c.h.b16 %v902
    %v1616 = vunpack.c.l.b16 %v903
    %v1617 = vunpack.c.h.b16 %v903
    %v1618 = vunpack.c.l.b16 %v904
    %v1619 = vunpack.c.h.b16 %v904
    %v1620 = vunpack.c.l.b16 %v905
    %v1621 = vunpack.c.h.b16 %v905
    %v1622 = vunpack.c.l.b16 %v906
    %v1623 = vunpack.c.h.b16 %v906
    %v1624 = vunpack.c.l.b16 %v907
    %v1625 = vunpack.c.h.b16 %v907
    %v1626 = vunpack.c.l.b16 %v908
    %v1627 = vunpack.c.h.b16 %v908
    %v1628 = vunpack.c.l.b16 %v909
    %v1629 = vunpack.c.h.b16 %v909
    %v1630 = vunpack.c.l.b16 %v910
    %v1631 = vunpack.c.h.b16 %v910
    %v1632 = vunpack.c.l.b16 %v911
    %v1633 = vunpack.c.h.b16 %v911
    %v1634 = vunpack.c.l.b16 %v912
    %v1635 = vunpack.c.h.b16 %v912
    %v1636 = vunpack.c.l.b16 %v913
    %v1637 = vunpack.c.h.b16 %v913
    %v1638 = vunpack.c.l.b16 %v914
    %v1639 = vunpack.c.h.b16 %v914
    %v1640 = vunpack.c.l.b16 %v915
    %v1641 = vunpack.c.h.b16 %v915
    %v1642 = vunpack.c.l.b16 %v916
    %v1643 = vunpack.c.h.b16 %v916
    %v1644 = vunpack.c.l.b16 %v917
    %v1645 = vunpack.c.h.b16 %v917
    %v1646 = vunpack.c.l.b16 %v918
    %v1647 = vunpack.c.h.b16 %v918
    %v1648 = vunpack.c.l.b16 %v919
    %v1649 = vunpack.c.h.b16 %v919
    %v1650 = vunpack.c.l.b16 %v920
    %v1651 = vunpack.c.h.b16 %v920
    %v1652 = vunpack.c.l.b16 %v921
    %v1653 = vunpack.c.h.b16 %v921
    %v1654 = vunpack.c.l.b16 %v922
    %v1655 = vunpack.c.h.b16 %v922
    %v1656 = vunpack.c.l.b16 %v923
    %v1657 = vunpack.c.h.b16 %v923
    %v1658 = vunpack.c.l.b16 %v924
    %v1659 = vunpack.c.h.b16 %v924
    %v1660 = vunpack.c.l.b16 %v925
    %v1661 = vunpack.c.h.b16 %v925
    %v1662 = vunpack.c.l.b16 %v926
    %v1663 = vunpack.c.h.b16 %v926
    %v1664 = vunpack.c.l.b16 %v927
    %v1665 = vunpack.c.h.b16 %v927
    %v1666 = vunpack.c.l.b16 %v928
    %v1667 = vunpack.c.h.b16 %v928
    %v1668 = vunpack.c.l.b16 %v929
    %v1669 = vunpack.c.h.b16 %v929
    %v1670 = vunpack.c.l.b16 %v930
    %v1671 = vunpack.c.h.b16 %v930
    %v1672 = vunpack.c.l.b16 %v931
    %v1673 = vunpack.c.h.b16 %v931
    %v1674 = vunpack.c.l.b16 %v932
    %v1675 = vunpack.c.h.b16 %v932
    %v1676 = vunpack.c.l.b16 %v933
    %v1677 = vunpack.c.h.b16 %v933
    %v1678 = vunpack.c.l.b16 %v934
    %v1679 = vunpack.c.h.b16 %v934
    %v1680 = vunpack.c.l.b16 %v935
    %v1681 = vunpack.c.h.b16 %v935
    %v1682 = vunpack.c.l.b16 %v936
    %v1683 = vunpack.c.h.b16 %v936
    %v1684 = vunpack.c.l.b16 %v937
    %v1685 = vunpack.c.h.b16 %v937
    %v1686 = vunpack.c.l.b16 %v938
    %v1687 = vunpack.c.h.b16 %v938
    %v1688 = vunpack.c.l.b16 %v939
    %v1689 = vunpack.c.h.b16 %v939
    %v1690 = vunpack.c.l.b16 %v940
    %v1691 = vunpack.c.h.b16 %v940
    %v1692 = vunpack.c.l.b16 %v941
    %v1693 = vunpack.c.h.b16 %v941
    %v1694 = vunpack.c.l.b16 %v942
    %v1695 = vunpack.c.h.b16 %v942
    %v1696 = vunpack.c.l.b16 %v943
    %v1697 = vunpack.c.h.b16 %v943
    %v1698 = vunpack.c.l.b16 %v944
    %v1699 = vunpack.c.h.b16 %v944
    %v1700 = vunpack.c.l.b16 %v945
    %v1701 = vunpack.c.h.b16 %v945
    %v1702 = vunpack.c.l.b16 %v946
    %v1703 = vunpack.c.h.b16 %v946
    %v1704 = vunpack.c.l.b16 %v947
    %v1705 = vunpack.c.h.b16 %v947
    %v1706 = vunpack.c.l.b16 %v948
    %v1707 = vunpack.c.h.b16 %v948
    %v1708 = vunpack.c.l.b16 %v949
    %v1709 = vunpack.c.h.b16 %v949
    %v1710 = vunpack.c.l.b16 %v950
    %v1711 = vunpack.c.h.b16 %v950
    %v1712 = vunpack.c.l.b16 %v951
    %v1713 = vunpack.c.h.b16 %v951
    %v1714 = vunpack.c.l.b16 %v952
    %v1715 = vunpack.c.h.b16 %v952
    %v1716 = vunpack.c.l.b16 %v953
    %v1717 = vunpack.c.h.b16 %v953
    %v1718 = vunpack.c.l.b16 %v954
    %v1719 = vunpack.c.h.b16 %v954
    %v1720 = vunpack.c.l.b16 %v955
    %v1721 = vunpack.c.h.b16 %v955
    %v1722 = vunpack.c.l.b16 %v956
    %v1723 = vunpack.c.h.b16 %v956
    %v1724 = vunpack.c.l.b16 %v957
    %v1725 = vunpack.c.h.b16 %v957
    %v1726 = vunpack.c.l.b16 %v958
    %v1727 = vunpack.c.h.b16 %v958
    %v1728 = vunpack.c.l.b16 %v959
    %v1729 = vunpack.c.h.b16 %v959
    %v1730 = vunpack.c.l.b16 %v960
    %v1731 = vunpack.c.h.b16 %v960
    %v1732 = vunpack.c.l.b16 %v961
    %v1733 = vunpack.c.h.b16 %v961
    %v1734 = vunpack.c.l.b16 %v962
    %v1735 = vunpack.c.h.b16 %v962
    %v1736 = vunpack.c.l.b16 %v963
    %v1737 = vunpack.c.h.b16 %v963
    %v1738 = vunpack.c.l.b16 %v964
    %v1739 = vunpack.c.h.b16 %v964
    %v1740 = vunpack.c.l.b16 %v965
    %v1741 = vunpack.c.h.b16 %v965
    %v1742 = vunpack.c.l.b16 %v966
    %v1743 = vunpack.c.h.b16 %v966
    %v1744 = vunpack.c.l.b16 %v967
    %v1745 = vunpack.c.h.b16 %v967
    %v1746 = vunpack.c.l.b16 %v968
    %v1747 = vunpack.c.h.b16 %v968
    %v1748 = vunpack.c.l.b16 %v969
    %v1749 = vunpack.c.h.b16 %v969
    %v1750 = vunpack.c.l.b16 %v970
    %v1751 = vunpack.c.h.b16 %v970
    %v1752 = vunpack.c.l.b16 %v971
    %v1753 = vunpack.c.h.b16 %v971
    %v1754 = vunpack.c.l.b16 %v972
    %v1755 = vunpack.c.h.b16 %v972
    %v1756 = vunpack.c.l.b16 %v973
    %v1757 = vunpack.c.h.b16 %v973
    %v1758 = vunpack.c.l.b16 %v974
    %v1759 = vunpack.c.h.b16 %v974
    %v1760 = vunpack.c.l.b16 %v975
    %v1761 = vunpack.c.h.b16 %v975
    %v1762 = vunpack.c.l.b16 %v976
    %v1763 = vunpack.c.h.b16 %v976
    %v1764 = vunpack.c.l.b16 %v977
    %v1765 = vunpack.c.h.b16 %v977
    %v1766 = vunpack.c.l.b16 %v978
    %v1767 = vunpack.c.h.b16 %v978
    %v1768 = vunpack.c.l.b16 %v979
    %v1769 = vunpack.c.h.b16 %v979
    %v1770 = vpack.c.b16 %v1262, %v1258
    %v1771 = vpack.c.b16 %v1263, %v1259
    %v1772 = vpack.c.b16 %v1264, %v1260
    %v1773 = vpack.c.b16 %v1265, %v1261
    %v1774 = vpack.c.b16 %v1270, %v1266
    %v1775 = vpack.c.b16 %v1271, %v1267
    %v1776 = vpack.c.b16 %v1272, %v1268
    %v1777 = vpack.c.b16 %v1273, %v1269
    %v1778 = vpack.c.b16 %v1278, %v1274
    %v1779 = vpack.c.b16 %v1279, %v1275
    %v1780 = vpack.c.b16 %v1280, %v1276
    %v1781 = vpack.c.b16 %v1281, %v1277
    %v1782 = vpack.c.b16 %v1286, %v1282
    %v1783 = vpack.c.b16 %v1287, %v1283
    %v1784 = vpack.c.b16 %v1288, %v1284
    %v1785 = vpack.c.b16 %v1289, %v1285
    %v1786 = vpack.c.b16 %v1294, %v1290
    %v1787 = vpack.c.b16 %v1295, %v1291
    %v1788 = vpack.c.b16 %v1296, %v1292
    %v1789 = vpack.c.b16 %v1297, %v1293
    %v1790 = vpack.c.b16 %v1302, %v1298
    %v1791 = vpack.c.b16 %v1303, %v1299
    %v1792 = vpack.c.b16 %v1304, %v1300
    %v1793 = vpack.c.b16 %v1305, %v1301
    %v1794 = vpack.c.b16 %v1310, %v1306
    %v1795 = vpack.c.b16 %v1311, %v1307
    %v1796 = vpack.c.b16 %v1312, %v1308
    %v1797 = vpack.c.b16 %v1313, %v1309
    %v1798 = vpack.c.b16 %v1318, %v1314
    %v1799 = vpack.c.b16 %v1319, %v1315
    %v1800 = vpack.c.b16 %v1320, %v1316
    %v1801 = vpack.c.b16 %v1321, %v1317
    %v1802 = vpack.c.b16 %v1326, %v1322
    %v1803 = vpack.c.b16 %v1327, %v1323
    %v1804 = vpack.c.b16 %v1328, %v1324
    %v1805 = vpack.c.b16 %v1329, %v1325
    %v1806 = vpack.c.b16 %v1334, %v1330
    %v1807 = vpack.c.b16 %v1335, %v1331
    %v1808 = vpack.c.b16 %v1336, %v1332
    %v1809 = vpack.c.b16 %v1337, %v1333
    %v1810 = vpack.c.b16 %v1342, %v1338
    %v1811 = vpack.c.b16 %v1343, %v1339
    %v1812 = vpack.c.b16 %v1344, %v1340
    %v1813 = vpack.c.b16 %v1345, %v1341
    %v1814 = vpack.c.b16 %v1350, %v1346
    %v1815 = vpack.c.b16 %v1351, %v1347
    %v1816 = vpack.c.b16 %v1352, %v1348
    %v1817 = vpack.c.b16 %v1353, %v1349
    %v1818 = vpack.c.b16 %v1358, %v1354
    %v1819 = vpack.c.b16 %v1359, %v1355
    %v1820 = vpack.c.b16 %v1360, %v1356
    %v1821 = vpack.c.b16 %v1361, %v1357
    %v1822 = vpack.c.b16 %v1366, %v1362
    %v1823 = vpack.c.b16 %v1367, %v1363
    %v1824 = vpack.c.b16 %v1368, %v1364
    %v1825 = vpack.c.b16 %v1369, %v1365
    %v1826 = vpack.c.b16 %v1374, %v1370
    %v1827 = vpack.c.b16 %v1375, %v1371
    %v1828 = vpack.c.b16 %v1376, %v1372
    %v1829 = vpack.c.b16 %v1377, %v1373
    %v1830 = vpack.c.b16 %v1382, %v1378
    %v1831 = vpack.c.b16 %v1383, %v1379
    %v1832 = vpack.c.b16 %v1384, %v1380
    %v1833 = vpack.c.b16 %v1385, %v1381
    %v1834 = vpack.c.b16 %v1390, %v1386
    %v1835 = vpack.c.b16 %v1391, %v1387
    %v1836 = vpack.c.b16 %v1392, %v1388
    %v1837 = vpack.c.b16 %v1393, %v1389
    %v1838 = vpack.c.b16 %v1398, %v1394
    %v1839 = vpack.c.b16 %v1399, %v1395
    %v1840 = vpack.c.b16 %v1400, %v1396
    %v1841 = vpack.c.b16 %v1401, %v1397
    %v1842 = vpack.c.b16 %v1406, %v1402
    %v1843 = vpack.c.b16 %v1407, %v1403
    %v1844 = vpack.c.b16 %v1408, %v1404
    %v1845 = vpack.c.b16 %v1409, %v1405
    %v1846 = vpack.c.b16 %v1414, %v1410
    %v1847 = vpack.c.b16 %v1415, %v1411
    %v1848 = vpack.c.b16 %v1416, %v1412
    %v1849 = vpack.c.b16 %v1417, %v1413
    %v1850 = vpack.c.b16 %v1422, %v1418
    %v1851 = vpack.c.b16 %v1423, %v1419
    %v1852 = vpack.c.b16 %v1424, %v1420
    %v1853 = vpack.c.b16 %v1425, %v1421
    %v1854 = vpack.c.b16 %v1430, %v1426
    %v1855 = vpack.c.b16 %v1431, %v1427
    %v1856 = vpack.c.b16 %v1432, %v1428
    %v1857 = vpack.c.b16 %v1433, %v1429
    %v1858 = vpack.c.b16 %v1438, %v1434
    %v1859 = vpack.c.b16 %v1439, %v1435
    %v1860 = vpack.c.b16 %v1440, %v1436
    %v1861 = vpack.c.b16 %v1441, %v1437
    %v1862 = vpack.c.b16 %v1446, %v1442
    %v1863 = vpack.c.b16 %v1447, %v1443
    %v1864 = vpack.c.b16 %v1448, %v1444
    %v1865 = vpack.c.b16 %v1449, %v1445
    %v1866 = vpack.c.b16 %v1454, %v1450
    %v1867 = vpack.c.b16 %v1455, %v1451
    %v1868 = vpack.c.b16 %v1456, %v1452
    %v1869 = vpack.c.b16 %v1457, %v1453
    %v1870 = vpack.c.b16 %v1462, %v1458
    %v1871 = vpack.c.b16 %v1463, %v1459
    %v1872 = vpack.c.b16 %v1464, %v1460
    %v1873 = vpack.c.b16 %v1465, %v1461
    %v1874 = vpack.c.b16 %v1470, %v1466
    %v1875 = vpack.c.b16 %v1471, %v1467
    %v1876 = vpack.c.b16 %v1472, %v1468
    %v1877 = vpack.c.b16 %v1473, %v1469
    %v1878 = vpack.c.b16 %v1478, %v1474
    %v1879 = vpack.c.b16 %v1479, %v1475
    %v1880 = vpack.c.b16 %v1480, %v1476
    %v1881 = vpack.c.b16 %v1481, %v1477
    %v1882 = vpack.c.b16 %v1486, %v1482
    %v1883 = vpack.c.b16 %v1487, %v1483
    %v1884 = vpack.c.b16 %v1488, %v1484
    %v1885 = vpack.c.b16 %v1489, %v1485
    %v1886 = vpack.c.b16 %v1494, %v1490
    %v1887 = vpack.c.b16 %v1495, %v1491
    %v1888 = vpack.c.b16 %v1496, %v1492
    %v1889 = vpack.c.b16 %v1497, %v1493
    %v1890 = vpack.c.b16 %v1502, %v1498
    %v1891 = vpack.c.b16 %v1503, %v1499
    %v1892 = vpack.c.b16 %v1504, %v1500
    %v1893 = vpack.c.b16 %v1505, %v1501
    %v1894 = vpack.c.b16 %v1510, %v1506
    %v1895 = vpack.c.b16 %v1511, %v1507
    %v1896 = vpack.c.b16 %v1512, %v1508
    %v1897 = vpack.c.b16 %v1513, %v1509
    %v1898 = vpack.c.b16 %v1518, %v1514
    %v1899 = vpack.c.b16 %v1519, %v1515
    %v1900 = vpack.c.b16 %v1520, %v1516
    %v1901 = vpack.c.b16 %v1521, %v1517
    %v1902 = vpack.c.b16 %v1526, %v1522
    %v1903 = vpack.c.b16 %v1527, %v1523
    %v1904 = vpack.c.b16 %v1528, %v1524
    %v1905 = vpack.c.b16 %v1529, %v1525
    %v1906 = vpack.c.b16 %v1534, %v1530
    %v1907 = vpack.c.b16 %v1535, %v1531
    %v1908 = vpack.c.b16 %v1536, %v1532
    %v1909 = vpack.c.b16 %v1537, %v1533
    %v1910 = vpack.c.b16 %v1542, %v1538
    %v1911 = vpack.c.b16 %v1543, %v1539
    %v1912 = vpack.c.b16 %v1544, %v1540
    %v1913 = vpack.c.b16 %v1545, %v1541
    %v1914 = vpack.c.b16 %v1550, %v1546
    %v1915 = vpack.c.b16 %v1551, %v1547
    %v1916 = vpack.c.b16 %v1552, %v1548
    %v1917 = vpack.c.b16 %v1553, %v1549
    %v1918 = vpack.c.b16 %v1558, %v1554
    %v1919 = vpack.c.b16 %v1559, %v1555
    %v1920 = vpack.c.b16 %v1560, %v1556
    %v1921 = vpack.c.b16 %v1561, %v1557
    %v1922 = vpack.c.b16 %v1566, %v1562
    %v1923 = vpack.c.b16 %v1567, %v1563
    %v1924 = vpack.c.b16 %v1568, %v1564
    %v1925 = vpack.c.b16 %v1569, %v1565
    %v1926 = vpack.c.b16 %v1574, %v1570
    %v1927 = vpack.c.b16 %v1575, %v1571
    %v1928 = vpack.c.b16 %v1576, %v1572
    %v1929 = vpack.c.b16 %v1577, %v1573
    %v1930 = vpack.c.b16 %v1582, %v1578
    %v1931 = vpack.c.b16 %v1583, %v1579
    %v1932 = vpack.c.b16 %v1584, %v1580
    %v1933 = vpack.c.b16 %v1585, %v1581
    %v1934 = vpack.c.b16 %v1590, %v1586
    %v1935 = vpack.c.b16 %v1591, %v1587
    %v1936 = vpack.c.b16 %v1592, %v1588
    %v1937 = vpack.c.b16 %v1593, %v1589
    %v1938 = vpack.c.b16 %v1598, %v1594
    %v1939 = vpack.c.b16 %v1599, %v1595
    %v1940 = vpack.c.b16 %v1600, %v1596
    %v1941 = vpack.c.b16 %v1601, %v1597
    %v1942 = vpack.c.b16 %v1606, %v1602
    %v1943 = vpack.c.b16 %v1607, %v1603
    %v1944 = vpack.c.b16 %v1608, %v1604
    %v1945 = vpack.c.b16 %v1609, %v1605
    %v1946 = vpack.c.b16 %v1614, %v1610
    %v1947 = vpack.c.b16 %v1615, %v1611
    %v1948 = vpack.c.b16 %v1616, %v1612
    %v1949 = vpack.c.b16 %v1617, %v1613
    %v1950 = vpack.c.b16 %v1622, %v1618
    %v1951 = vpack.c.b16 %v1623, %v1619
    %v1952 = vpack.c.b16 %v1624, %v1620
    %v1953 = vpack.c.b16 %v1625, %v1621
    %v1954 = vpack.c.b16 %v1630, %v1626
    %v1955 = vpack.c.b16 %v1631, %v1627
    %v1956 = vpack.c.b16 %v1632, %v1628
    %v1957 = vpack.c.b16 %v1633, %v1629
    %v1958 = vpack.c.b16 %v1638, %v1634
    %v1959 = vpack.c.b16 %v1639, %v1635
    %v1960 = vpack.c.b16 %v1640, %v1636
    %v1961 = vpack.c.b16 %v1641, %v1637
    %v1962 = vpack.c.b16 %v1646, %v1642
    %v1963 = vpack.c.b16 %v1647, %v1643
    %v1964 = vpack.c.b16 %v1648, %v1644
    %v1965 = vpack.c.b16 %v1649, %v1645
    %v1966 = vpack.c.b16 %v1654, %v1650
    %v1967 = vpack.c.b16 %v1655, %v1651
    %v1968 = vpack.c.b16 %v1656, %v1652
    %v1969 = vpack.c.b16 %v1657, %v1653
    %v1970 = vpack.c.b16 %v1662, %v1658
    %v1971 = vpack.c.b16 %v1663, %v1659
    %v1972 = vpack.c.b16 %v1664, %v1660
    %v1973 = vpack.c.b16 %v1665, %v1661
    %v1974 = vpack.c.b16 %v1670, %v1666
    %v1975 = vpack.c.b16 %v1671, %v1667
    %v1976 = vpack.c.b16 %v1672, %v1668
    %v1977 = vpack.c.b16 %v1673, %v1669
    %v1978 = vpack.c.b16 %v1678, %v1674
    %v1979 = vpack.c.b16 %v1679, %v1675
    %v1980 = vpack.c.b16 %v1680, %v1676
    %v1981 = vpack.c.b16 %v1681, %v1677
    %v1982 = vpack.c.b16 %v1686, %v1682
    %v1983 = vpack.c.b16 %v1687, %v1683
    %v1984 = vpack.c.b16 %v1688, %v1684
    %v1985 = vpack.c.b16 %v1689, %v1685
    %v1986 = vpack.c.b16 %v1694, %v1690
    %v1987 = vpack.c.b16 %v1695, %v1691
    %v1988 = vpack.c.b16 %v1696, %v1692
    %v1989 = vpack.c.b16 %v1697, %v1693
    %v1990 = vpack.c.b16 %v1702, %v1698
    %v1991 = vpack.c.b16 %v1703, %v1699
    %v1992 = vpack.c.b16 %v1704, %v1700
    %v1993 = vpack.c.b16 %v1705, %v1701
    %v1994 = vpack.c.b16 %v1710, %v1706
    %v1995 = vpack.c.b16 %v1711, %v1707
    %v1996 = vpack.c.b16 %v1712, %v1708
    %v1997 = vpack.c.b16 %v1713, %v1709
    %v1998 = vpack.c.b16 %v1718, %v1714
    %v1999 = vpack.c.b16 %v1719, %v1715
    %v2000 = vpack.c.b16 %v1720, %v1716
    %v2001 = vpack.c.b16 %v1721, %v1717
    %v2002 = vpack.c.b16 %v1726, %v1722
    %v2003 = vpack.c.b16 %v1727, %v1723
    %v2004 = vpack.c.b16 %v1728, %v1724
    %v2005 = vpack.c.b16 %v1729, %v1725
    %v2006 = vpack.c.b16 %v1734, %v1730
    %v2007 = vpack.c.b16 %v1735, %v1731
    %v2008 = vpack.c.b16 %v1736, %v1732
    %v2009 = vpack.c.b16 %v1737, %v1733
    %v2010 = vpack.c.b16 %v1742, %v1738
    %v2011 = vpack.c.b16 %v1743, %v1739
    %v2012 = vpack.c.b16 %v1744, %v1740
    %v2013 = vpack.c.b16 %v1745, %v1741
    %v2014 = vpack.c.b16 %v1750, %v1746
    %v2015 = vpack.c.b16 %v1751, %v1747
    %v2016 = vpack.c.b16 %v1752, %v1748
    %v2017 = vpack.c.b16 %v1753, %v1749
    %v2018 = vpack.c.b16 %v1758, %v1754
    %v2019 = vpack.c.b16 %v1759, %v1755
    %v2020 = vpack.c.b16 %v1760, %v1756
    %v2021 = vpack.c.b16 %v1761, %v1757
    %v2022 = vpack.c.b16 %v1766, %v1762
    %v2023 = vpack.c.b16 %v1767, %v1763
    %v2024 = vpack.c.b16 %v1768, %v1764
    %v2025 = vpack.c.b16 %v1769, %v1765
    %2282 = vmatprep.subr.bf16.mxu0 %v1799
    %2283 = vmatpush1.bf16.msra.mxu0 %v1798
    %2284 = vmatprep.subr.bf16.mxu0 %v1795
    %2285 = vmatpush1.bf16.msra.mxu0 %v1794
    %2286 = vmatprep.subr.bf16.mxu0 %v1791
    %2287 = vmatpush1.bf16.msra.mxu0 %v1790
    %2288 = vmatprep.subr.bf16.mxu0 %v1787
    %2289 = vmatpush1.bf16.msra.mxu0 %v1786
    %2290 = vmatprep.subr.bf16.mxu0 %v1783
    %2291 = vmatpush1.bf16.msra.mxu0 %v1782
    %2292 = vmatprep.subr.bf16.mxu0 %v1779
    %2293 = vmatpush1.bf16.msra.mxu0 %v1778
    %2294 = vmatprep.subr.bf16.mxu0 %v1775
    %2295 = vmatpush1.bf16.msra.mxu0 %v1774
    %2296 = vmatprep.subr.bf16.mxu0 %v1771
    %2297 = vmatpush1.bf16.msra.mxu0 %v1770
    %2298 = vmatprep.subr.bf16.mxu0 %v1831
    %2299 = vmatpush2.bf16.msra.mxu0 %v1830
    %2300 = vmatprep.subr.bf16.mxu0 %v1827
    %2301 = vmatpush2.bf16.msra.mxu0 %v1826
    %2302 = vmatprep.subr.bf16.mxu0 %v1823
    %2303 = vmatpush2.bf16.msra.mxu0 %v1822
    %2304 = vmatprep.subr.bf16.mxu0 %v1819
    %2305 = vmatpush2.bf16.msra.mxu0 %v1818
    %2306 = vmatprep.subr.bf16.mxu0 %v1815
    %2307 = vmatpush2.bf16.msra.mxu0 %v1814
    %2308 = vmatprep.subr.bf16.mxu0 %v1811
    %2309 = vmatpush2.bf16.msra.mxu0 %v1810
    %2310 = vmatprep.subr.bf16.mxu0 %v1807
    %2311 = vmatpush2.bf16.msra.mxu0 %v1806
    %2312 = vmatprep.subr.bf16.mxu0 %v1803
    %2313 = vmatpush2.bf16.msra.mxu0 %v1802
    %2314 = vmatprep.mubr.bf16.mxu0 %v717
    %2315 = vmatmul.mubr.bf16.gmra.mxu0 %v716
    %v2316 = vpop.f32.mrf.mxu0
    %v2317 = vadd.f32 %v985, %v2316
    %v2318 = vpop.f32.mrf.mxu0
    %v2319 = vadd.f32 %v989, %v2318
    %v2320 = vpop.f32.mrf.mxu0
    %v2321 = vadd.f32 %v985, %v2320
    %v2322 = vpop.f32.mrf.mxu0
    %v2323 = vadd.f32 %v989, %v2322
    %2324 = vdwg.mxu0
    %2325 = vmatprep.subr.bf16.mxu0 %v1863
    %2326 = vmatpush1.bf16.msra.mxu0 %v1862
    %2327 = vmatprep.subr.bf16.mxu0 %v1859
    %2328 = vmatpush1.bf16.msra.mxu0 %v1858
    %2329 = vmatprep.subr.bf16.mxu0 %v1855
    %2330 = vmatpush1.bf16.msra.mxu0 %v1854
    %2331 = vmatprep.subr.bf16.mxu0 %v1851
    %2332 = vmatpush1.bf16.msra.mxu0 %v1850
    %2333 = vmatprep.subr.bf16.mxu0 %v1847
    %2334 = vmatpush1.bf16.msra.mxu0 %v1846
    %2335 = vmatprep.subr.bf16.mxu0 %v1843
    %2336 = vmatpush1.bf16.msra.mxu0 %v1842
    %2337 = vmatprep.subr.bf16.mxu0 %v1839
    %2338 = vmatpush1.bf16.msra.mxu0 %v1838
    %2339 = vmatprep.subr.bf16.mxu0 %v1835
    %2340 = vmatpush1.bf16.msra.mxu0 %v1834
    %2341 = vmatprep.subr.bf16.mxu0 %v1895
    %2342 = vmatpush2.bf16.msra.mxu0 %v1894
    %2343 = vmatprep.subr.bf16.mxu0 %v1891
    %2344 = vmatpush2.bf16.msra.mxu0 %v1890
    %2345 = vmatprep.subr.bf16.mxu0 %v1887
    %2346 = vmatpush2.bf16.msra.mxu0 %v1886
    %2347 = vmatprep.subr.bf16.mxu0 %v1883
    %2348 = vmatpush2.bf16.msra.mxu0 %v1882
    %2349 = vmatprep.subr.bf16.mxu0 %v1879
    %2350 = vmatpush2.bf16.msra.mxu0 %v1878
    %2351 = vmatprep.subr.bf16.mxu0 %v1875
    %2352 = vmatpush2.bf16.msra.mxu0 %v1874
    %2353 = vmatprep.subr.bf16.mxu0 %v1871
    %2354 = vmatpush2.bf16.msra.mxu0 %v1870
    %2355 = vmatprep.subr.bf16.mxu0 %v1867
    %2356 = vmatpush2.bf16.msra.mxu0 %v1866
    %2357 = vmatprep.mubr.bf16.mxu0 %v719
    %2358 = vmatmul.mubr.bf16.gmra.mxu0 %v718
    %v2359 = vpop.f32.mrf.mxu0
    %v2360 = vadd.f32 %v2317, %v2359
    %v2361 = vpop.f32.mrf.mxu0
    %v2362 = vadd.f32 %v2319, %v2361
    %v2363 = vpop.f32.mrf.mxu0
    %v2364 = vadd.f32 %v2321, %v2363
    %v2365 = vpop.f32.mrf.mxu0
    %v2366 = vadd.f32 %v2323, %v2365
    %2367 = vdwg.mxu0
    %2368 = vmatprep.subr.bf16.mxu0 %v1927
    %2369 = vmatpush1.bf16.msra.mxu0 %v1926
    %2370 = vmatprep.subr.bf16.mxu0 %v1923
    %2371 = vmatpush1.bf16.msra.mxu0 %v1922
    %2372 = vmatprep.subr.bf16.mxu0 %v1919
    %2373 = vmatpush1.bf16.msra.mxu0 %v1918
    %2374 = vmatprep.subr.bf16.mxu0 %v1915
    %2375 = vmatpush1.bf16.msra.mxu0 %v1914
    %2376 = vmatprep.subr.bf16.mxu0 %v1911
    %2377 = vmatpush1.bf16.msra.mxu0 %v1910
    %2378 = vmatprep.subr.bf16.mxu0 %v1907
    %2379 = vmatpush1.bf16.msra.mxu0 %v1906
    %2380 = vmatprep.subr.bf16.mxu0 %v1903
    %2381 = vmatpush1.bf16.msra.mxu0 %v1902
    %2382 = vmatprep.subr.bf16.mxu0 %v1899
    %2383 = vmatpush1.bf16.msra.mxu0 %v1898
    %2384 = vmatprep.subr.bf16.mxu0 %v1959
    %2385 = vmatpush2.bf16.msra.mxu0 %v1958
    %2386 = vmatprep.subr.bf16.mxu0 %v1955
    %2387 = vmatpush2.bf16.msra.mxu0 %v1954
    %2388 = vmatprep.subr.bf16.mxu0 %v1951
    %2389 = vmatpush2.bf16.msra.mxu0 %v1950
    %2390 = vmatprep.subr.bf16.mxu0 %v1947
    %2391 = vmatpush2.bf16.msra.mxu0 %v1946
    %2392 = vmatprep.subr.bf16.mxu0 %v1943
    %2393 = vmatpush2.bf16.msra.mxu0 %v1942
    %2394 = vmatprep.subr.bf16.mxu0 %v1939
    %2395 = vmatpush2.bf16.msra.mxu0 %v1938
    %2396 = vmatprep.subr.bf16.mxu0 %v1935
    %2397 = vmatpush2.bf16.msra.mxu0 %v1934
    %2398 = vmatprep.subr.bf16.mxu0 %v1931
    %2399 = vmatpush2.bf16.msra.mxu0 %v1930
    %2400 = vmatprep.mubr.bf16.mxu0 %v721
    %2401 = vmatmul.mubr.bf16.gmra.mxu0 %v720
    %v2402 = vpop.f32.mrf.mxu0
    %v2403 = vadd.f32 %v2360, %v2402
    %v2404 = vpop.f32.mrf.mxu0
    %v2405 = vadd.f32 %v2362, %v2404
    %v2406 = vpop.f32.mrf.mxu0
    %v2407 = vadd.f32 %v2364, %v2406
    %v2408 = vpop.f32.mrf.mxu0
    %v2409 = vadd.f32 %v2366, %v2408
    %2410 = vdwg.mxu0
    %2411 = vmatprep.subr.bf16.mxu0 %v1991
    %2412 = vmatpush1.bf16.msra.mxu0 %v1990
    %2413 = vmatprep.subr.bf16.mxu0 %v1987
    %2414 = vmatpush1.bf16.msra.mxu0 %v1986
    %2415 = vmatprep.subr.bf16.mxu0 %v1983
    %2416 = vmatpush1.bf16.msra.mxu0 %v1982
    %2417 = vmatprep.subr.bf16.mxu0 %v1979
    %2418 = vmatpush1.bf16.msra.mxu0 %v1978
    %2419 = vmatprep.subr.bf16.mxu0 %v1975
    %2420 = vmatpush1.bf16.msra.mxu0 %v1974
    %2421 = vmatprep.subr.bf16.mxu0 %v1971
    %2422 = vmatpush1.bf16.msra.mxu0 %v1970
    %2423 = vmatprep.subr.bf16.mxu0 %v1967
    %2424 = vmatpush1.bf16.msra.mxu0 %v1966
    %2425 = vmatprep.subr.bf16.mxu0 %v1963
    %2426 = vmatpush1.bf16.msra.mxu0 %v1962
    %2427 = vmatprep.subr.bf16.mxu0 %v2023
    %2428 = vmatpush2.bf16.msra.mxu0 %v2022
    %2429 = vmatprep.subr.bf16.mxu0 %v2019
    %2430 = vmatpush2.bf16.msra.mxu0 %v2018
    %2431 = vmatprep.subr.bf16.mxu0 %v2015
    %2432 = vmatpush2.bf16.msra.mxu0 %v2014
    %2433 = vmatprep.subr.bf16.mxu0 %v2011
    %2434 = vmatpush2.bf16.msra.mxu0 %v2010
    %2435 = vmatprep.subr.bf16.mxu0 %v2007
    %2436 = vmatpush2.bf16.msra.mxu0 %v2006
    %2437 = vmatprep.subr.bf16.mxu0 %v2003
    %2438 = vmatpush2.bf16.msra.mxu0 %v2002
    %2439 = vmatprep.subr.bf16.mxu0 %v1999
    %2440 = vmatpush2.bf16.msra.mxu0 %v1998
    %2441 = vmatprep.subr.bf16.mxu0 %v1995
    %2442 = vmatpush2.bf16.msra.mxu0 %v1994
    %2443 = vmatprep.mubr.bf16.mxu0 %v723
    %2444 = vmatmul.mubr.bf16.gmra.mxu0 %v722
    %v2445 = vpop.f32.mrf.mxu0
    %v2446 = vadd.f32 %v2403, %v2445
    %v2447 = vpop.f32.mrf.mxu0
    %v2448 = vadd.f32 %v2405, %v2447
    %v2449 = vpop.f32.mrf.mxu0
    %v2450 = vadd.f32 %v2407, %v2449
    %v2451 = vpop.f32.mrf.mxu0
    %v2452 = vadd.f32 %v2409, %v2451
    %2453 = vdwg.mxu0
    %2454 = vmatprep.subr.bf16.mxu0 %v1801
    %2455 = vmatpush1.bf16.msra.mxu0 %v1800
    %2456 = vmatprep.subr.bf16.mxu0 %v1797
    %2457 = vmatpush1.bf16.msra.mxu0 %v1796
    %2458 = vmatprep.subr.bf16.mxu0 %v1793
    %2459 = vmatpush1.bf16.msra.mxu0 %v1792
    %2460 = vmatprep.subr.bf16.mxu0 %v1789
    %2461 = vmatpush1.bf16.msra.mxu0 %v1788
    %2462 = vmatprep.subr.bf16.mxu0 %v1785
    %2463 = vmatpush1.bf16.msra.mxu0 %v1784
    %2464 = vmatprep.subr.bf16.mxu0 %v1781
    %2465 = vmatpush1.bf16.msra.mxu0 %v1780
    %2466 = vmatprep.subr.bf16.mxu0 %v1777
    %2467 = vmatpush1.bf16.msra.mxu0 %v1776
    %2468 = vmatprep.subr.bf16.mxu0 %v1773
    %2469 = vmatpush1.bf16.msra.mxu0 %v1772
    %2470 = vmatprep.subr.bf16.mxu0 %v1833
    %2471 = vmatpush2.bf16.msra.mxu0 %v1832
    %2472 = vmatprep.subr.bf16.mxu0 %v1829
    %2473 = vmatpush2.bf16.msra.mxu0 %v1828
    %2474 = vmatprep.subr.bf16.mxu0 %v1825
    %2475 = vmatpush2.bf16.msra.mxu0 %v1824
    %2476 = vmatprep.subr.bf16.mxu0 %v1821
    %2477 = vmatpush2.bf16.msra.mxu0 %v1820
    %2478 = vmatprep.subr.bf16.mxu0 %v1817
    %2479 = vmatpush2.bf16.msra.mxu0 %v1816
    %2480 = vmatprep.subr.bf16.mxu0 %v1813
    %2481 = vmatpush2.bf16.msra.mxu0 %v1812
    %2482 = vmatprep.subr.bf16.mxu0 %v1809
    %2483 = vmatpush2.bf16.msra.mxu0 %v1808
    %2484 = vmatprep.subr.bf16.mxu0 %v1805
    %2485 = vmatpush2.bf16.msra.mxu0 %v1804
    %2486 = vmatprep.mubr.bf16.mxu0 %v717
    %2487 = vmatmul.mubr.bf16.gmra.mxu0 %v716
    %v2488 = vpop.f32.mrf.mxu0
    %v2489 = vadd.f32 %v993, %v2488
    %v2490 = vpop.f32.mrf.mxu0
    %v2491 = vadd.f32 %v997, %v2490
    %v2492 = vpop.f32.mrf.mxu0
    %v2493 = vadd.f32 %v993, %v2492
    %v2494 = vpop.f32.mrf.mxu0
    %v2495 = vadd.f32 %v997, %v2494
    %2496 = vdwg.mxu0
    %2497 = vmatprep.subr.bf16.mxu0 %v1865
    %2498 = vmatpush1.bf16.msra.mxu0 %v1864
    %2499 = vmatprep.subr.bf16.mxu0 %v1861
    %2500 = vmatpush1.bf16.msra.mxu0 %v1860
    %2501 = vmatprep.subr.bf16.mxu0 %v1857
    %2502 = vmatpush1.bf16.msra.mxu0 %v1856
    %2503 = vmatprep.subr.bf16.mxu0 %v1853
    %2504 = vmatpush1.bf16.msra.mxu0 %v1852
    %2505 = vmatprep.subr.bf16.mxu0 %v1849
    %2506 = vmatpush1.bf16.msra.mxu0 %v1848
    %2507 = vmatprep.subr.bf16.mxu0 %v1845
    %2508 = vmatpush1.bf16.msra.mxu0 %v1844
    %2509 = vmatprep.subr.bf16.mxu0 %v1841
    %2510 = vmatpush1.bf16.msra.mxu0 %v1840
    %2511 = vmatprep.subr.bf16.mxu0 %v1837
    %2512 = vmatpush1.bf16.msra.mxu0 %v1836
    %2513 = vmatprep.subr.bf16.mxu0 %v1897
    %2514 = vmatpush2.bf16.msra.mxu0 %v1896
    %2515 = vmatprep.subr.bf16.mxu0 %v1893
    %2516 = vmatpush2.bf16.msra.mxu0 %v1892
    %2517 = vmatprep.subr.bf16.mxu0 %v1889
    %2518 = vmatpush2.bf16.msra.mxu0 %v1888
    %2519 = vmatprep.subr.bf16.mxu0 %v1885
    %2520 = vmatpush2.bf16.msra.mxu0 %v1884
    %2521 = vmatprep.subr.bf16.mxu0 %v1881
    %2522 = vmatpush2.bf16.msra.mxu0 %v1880
    %2523 = vmatprep.subr.bf16.mxu0 %v1877
    %2524 = vmatpush2.bf16.msra.mxu0 %v1876
    %2525 = vmatprep.subr.bf16.mxu0 %v1873
    %2526 = vmatpush2.bf16.msra.mxu0 %v1872
    %2527 = vmatprep.subr.bf16.mxu0 %v1869
    %2528 = vmatpush2.bf16.msra.mxu0 %v1868
    %2529 = vmatprep.mubr.bf16.mxu0 %v719
    %2530 = vmatmul.mubr.bf16.gmra.mxu0 %v718
    %v2531 = vpop.f32.mrf.mxu0
    %v2532 = vadd.f32 %v2489, %v2531
    %v2533 = vpop.f32.mrf.mxu0
    %v2534 = vadd.f32 %v2491, %v2533
    %v2535 = vpop.f32.mrf.mxu0
    %v2536 = vadd.f32 %v2493, %v2535
    %v2537 = vpop.f32.mrf.mxu0
    %v2538 = vadd.f32 %v2495, %v2537
    %2539 = vdwg.mxu0
    %2540 = vmatprep.subr.bf16.mxu0 %v1929
    %2541 = vmatpush1.bf16.msra.mxu0 %v1928
    %2542 = vmatprep.subr.bf16.mxu0 %v1925
    %2543 = vmatpush1.bf16.msra.mxu0 %v1924
    %2544 = vmatprep.subr.bf16.mxu0 %v1921
    %2545 = vmatpush1.bf16.msra.mxu0 %v1920
    %2546 = vmatprep.subr.bf16.mxu0 %v1917
    %2547 = vmatpush1.bf16.msra.mxu0 %v1916
    %2548 = vmatprep.subr.bf16.mxu0 %v1913
    %2549 = vmatpush1.bf16.msra.mxu0 %v1912
    %2550 = vmatprep.subr.bf16.mxu0 %v1909
    %2551 = vmatpush1.bf16.msra.mxu0 %v1908
    %2552 = vmatprep.subr.bf16.mxu0 %v1905
    %2553 = vmatpush1.bf16.msra.mxu0 %v1904
    %2554 = vmatprep.subr.bf16.mxu0 %v1901
    %2555 = vmatpush1.bf16.msra.mxu0 %v1900
    %2556 = vmatprep.subr.bf16.mxu0 %v1961
    %2557 = vmatpush2.bf16.msra.mxu0 %v1960
    %2558 = vmatprep.subr.bf16.mxu0 %v1957
    %2559 = vmatpush2.bf16.msra.mxu0 %v1956
    %2560 = vmatprep.subr.bf16.mxu0 %v1953
    %2561 = vmatpush2.bf16.msra.mxu0 %v1952
    %2562 = vmatprep.subr.bf16.mxu0 %v1949
    %2563 = vmatpush2.bf16.msra.mxu0 %v1948
    %2564 = vmatprep.subr.bf16.mxu0 %v1945
    %2565 = vmatpush2.bf16.msra.mxu0 %v1944
    %2566 = vmatprep.subr.bf16.mxu0 %v1941
    %2567 = vmatpush2.bf16.msra.mxu0 %v1940
    %2568 = vmatprep.subr.bf16.mxu0 %v1937
    %2569 = vmatpush2.bf16.msra.mxu0 %v1936
    %2570 = vmatprep.subr.bf16.mxu0 %v1933
    %2571 = vmatpush2.bf16.msra.mxu0 %v1932
    %2572 = vmatprep.mubr.bf16.mxu0 %v721
    %2573 = vmatmul.mubr.bf16.gmra.mxu0 %v720
    %v2574 = vpop.f32.mrf.mxu0
    %v2575 = vadd.f32 %v2532, %v2574
    %v2576 = vpop.f32.mrf.mxu0
    %v2577 = vadd.f32 %v2534, %v2576
    %v2578 = vpop.f32.mrf.mxu0
    %v2579 = vadd.f32 %v2536, %v2578
    %v2580 = vpop.f32.mrf.mxu0
    %v2581 = vadd.f32 %v2538, %v2580
    %2582 = vdwg.mxu0
    %2583 = vmatprep.subr.bf16.mxu0 %v1993
    %2584 = vmatpush1.bf16.msra.mxu0 %v1992
    %2585 = vmatprep.subr.bf16.mxu0 %v1989
    %2586 = vmatpush1.bf16.msra.mxu0 %v1988
    %2587 = vmatprep.subr.bf16.mxu0 %v1985
    %2588 = vmatpush1.bf16.msra.mxu0 %v1984
    %2589 = vmatprep.subr.bf16.mxu0 %v1981
    %2590 = vmatpush1.bf16.msra.mxu0 %v1980
    %2591 = vmatprep.subr.bf16.mxu0 %v1977
    %2592 = vmatpush1.bf16.msra.mxu0 %v1976
    %2593 = vmatprep.subr.bf16.mxu0 %v1973
    %2594 = vmatpush1.bf16.msra.mxu0 %v1972
    %2595 = vmatprep.subr.bf16.mxu0 %v1969
    %2596 = vmatpush1.bf16.msra.mxu0 %v1968
    %2597 = vmatprep.subr.bf16.mxu0 %v1965
    %2598 = vmatpush1.bf16.msra.mxu0 %v1964
    %2599 = vmatprep.subr.bf16.mxu0 %v2025
    %2600 = vmatpush2.bf16.msra.mxu0 %v2024
    %2601 = vmatprep.subr.bf16.mxu0 %v2021
    %2602 = vmatpush2.bf16.msra.mxu0 %v2020
    %2603 = vmatprep.subr.bf16.mxu0 %v2017
    %2604 = vmatpush2.bf16.msra.mxu0 %v2016
    %2605 = vmatprep.subr.bf16.mxu0 %v2013
    %2606 = vmatpush2.bf16.msra.mxu0 %v2012
    %2607 = vmatprep.subr.bf16.mxu0 %v2009
    %2608 = vmatpush2.bf16.msra.mxu0 %v2008
    %2609 = vmatprep.subr.bf16.mxu0 %v2005
    %2610 = vmatpush2.bf16.msra.mxu0 %v2004
    %2611 = vmatprep.subr.bf16.mxu0 %v2001
    %2612 = vmatpush2.bf16.msra.mxu0 %v2000
    %2613 = vmatprep.subr.bf16.mxu0 %v1997
    %2614 = vmatpush2.bf16.msra.mxu0 %v1996
    %2615 = vmatprep.mubr.bf16.mxu0 %v723
    %2616 = vmatmul.mubr.bf16.gmra.mxu0 %v722
    %v2617 = vpop.f32.mrf.mxu0
    %v2618 = vadd.f32 %v2575, %v2617
    %v2619 = vpop.f32.mrf.mxu0
    %v2620 = vadd.f32 %v2577, %v2619
    %v2621 = vpop.f32.mrf.mxu0
    %v2622 = vadd.f32 %v2579, %v2621
    %v2623 = vpop.f32.mrf.mxu0
    %v2624 = vadd.f32 %v2581, %v2623
    %2625 = vdwg.mxu0
    %v2626 = vmax.f32 %v2446, 0.0
    %v2627 = vmax.f32 %v2448, 0.0
    %v2628 = vmax.f32 %v2618, 0.0
    %v2629 = vmax.f32 %v2620, 0.0
    %v2630 = vmax.f32 %v2450, 0.0
    %v2631 = vmax.f32 %v2452, 0.0
    %v2632 = vmax.f32 %v2622, 0.0
    %v2633 = vmax.f32 %v2624, 0.0
    %v2634 = vpack.c.bf16 %v2630, %v2626
    %v2635 = vpack.c.bf16 %v2631, %v2627
    %v2636 = vpack.c.bf16 %v2632, %v2628
    %v2637 = vpack.c.bf16 %v2633, %v2629
    %v2638 = vld [vmem:[#allocation10] sm:$0xf]
    %v2639 = vld [vmem:[#allocation10 + $0x4] sm:$0xf]
    %v2640 = vld [vmem:[#allocation10 + $0x8] sm:$0xf]
    %v2641 = vld [vmem:[#allocation10 + $0xc] sm:$0xf]
    %v2642 = vld [vmem:[#allocation10 + $0x10] sm:$0xf]
    %v2643 = vld [vmem:[#allocation10 + $0x14] sm:$0xf]
    %v2644 = vld [vmem:[#allocation10 + $0x18] sm:$0xf]
    %v2645 = vld [vmem:[#allocation10 + $0x1c] sm:$0xf]
    %v2646 = vld [vmem:[#allocation10 + $0x20] sm:$0xf]
    %v2647 = vld [vmem:[#allocation10 + $0x24] sm:$0xf]
    %v2648 = vld [vmem:[#allocation10 + $0x28] sm:$0xf]
    %v2649 = vld [vmem:[#allocation10 + $0x2c] sm:$0xf]
    %v2650 = vld [vmem:[#allocation10 + $0x30] sm:$0xf]
    %v2651 = vld [vmem:[#allocation10 + $0x34] sm:$0xf]
    %v2652 = vld [vmem:[#allocation10 + $0x38] sm:$0xf]
    %v2653 = vld [vmem:[#allocation10 + $0x3c] sm:$0xf]
    %v2654 = vld [vmem:[#allocation10 + $0x40] sm:$0xf]
    %v2655 = vld [vmem:[#allocation10 + $0x44] sm:$0xf]
    %v2656 = vld [vmem:[#allocation10 + $0x48] sm:$0xf]
    %v2657 = vld [vmem:[#allocation10 + $0x4c] sm:$0xf]
    %v2658 = vld [vmem:[#allocation10 + $0x50] sm:$0xf]
    %v2659 = vld [vmem:[#allocation10 + $0x54] sm:$0xf]
    %v2660 = vld [vmem:[#allocation10 + $0x58] sm:$0xf]
    %v2661 = vld [vmem:[#allocation10 + $0x5c] sm:$0xf]
    %v2662 = vld [vmem:[#allocation10 + $0x60] sm:$0xf]
    %v2663 = vld [vmem:[#allocation10 + $0x64] sm:$0xf]
    %v2664 = vld [vmem:[#allocation10 + $0x68] sm:$0xf]
    %v2665 = vld [vmem:[#allocation10 + $0x6c] sm:$0xf]
    %v2666 = vld [vmem:[#allocation10 + $0x70] sm:$0xf]
    %v2667 = vld [vmem:[#allocation10 + $0x74] sm:$0xf]
    %v2668 = vld [vmem:[#allocation10 + $0x78] sm:$0xf]
    %v2669 = vld [vmem:[#allocation10 + $0x7c] sm:$0xf]
    %v2670 = vld [vmem:[#allocation10 + $0x80] sm:$0xf]
    %v2671 = vld [vmem:[#allocation10 + $0x84] sm:$0xf]
    %v2672 = vld [vmem:[#allocation10 + $0x88] sm:$0xf]
    %v2673 = vld [vmem:[#allocation10 + $0x8c] sm:$0xf]
    %v2674 = vld [vmem:[#allocation10 + $0x90] sm:$0xf]
    %v2675 = vld [vmem:[#allocation10 + $0x94] sm:$0xf]
    %v2676 = vld [vmem:[#allocation10 + $0x98] sm:$0xf]
    %v2677 = vld [vmem:[#allocation10 + $0x9c] sm:$0xf]
    %v2678 = vld [vmem:[#allocation10 + $0xa0] sm:$0xf]
    %v2679 = vld [vmem:[#allocation10 + $0xa4] sm:$0xf]
    %v2680 = vld [vmem:[#allocation10 + $0xa8] sm:$0xf]
    %v2681 = vld [vmem:[#allocation10 + $0xac] sm:$0xf]
    %v2682 = vld [vmem:[#allocation10 + $0xb0] sm:$0xf]
    %v2683 = vld [vmem:[#allocation10 + $0xb4] sm:$0xf]
    %v2684 = vld [vmem:[#allocation10 + $0xb8] sm:$0xf]
    %v2685 = vld [vmem:[#allocation10 + $0xbc] sm:$0xf]
    %v2686 = vld [vmem:[#allocation10 + $0xc0] sm:$0xf]
    %v2687 = vld [vmem:[#allocation10 + $0xc4] sm:$0xf]
    %v2688 = vld [vmem:[#allocation10 + $0xc8] sm:$0xf]
    %v2689 = vld [vmem:[#allocation10 + $0xcc] sm:$0xf]
    %v2690 = vld [vmem:[#allocation10 + $0xd0] sm:$0xf]
    %v2691 = vld [vmem:[#allocation10 + $0xd4] sm:$0xf]
    %v2692 = vld [vmem:[#allocation10 + $0xd8] sm:$0xf]
    %v2693 = vld [vmem:[#allocation10 + $0xdc] sm:$0xf]
    %v2694 = vld [vmem:[#allocation10 + $0xe0] sm:$0xf]
    %v2695 = vld [vmem:[#allocation10 + $0xe4] sm:$0xf]
    %v2696 = vld [vmem:[#allocation10 + $0xe8] sm:$0xf]
    %v2697 = vld [vmem:[#allocation10 + $0xec] sm:$0xf]
    %v2698 = vld [vmem:[#allocation10 + $0xf0] sm:$0xf]
    %v2699 = vld [vmem:[#allocation10 + $0xf4] sm:$0xf]
    %v2700 = vld [vmem:[#allocation10 + $0xf8] sm:$0xf]
    %v2701 = vld [vmem:[#allocation10 + $0xfc] sm:$0xf]
    %v2702 = vld [vmem:[%s6] sm:$0x1]
    %v2704 = vlaneseq
    %v2705 = vshrl.u32 %v2704, 7
    %v2706 = vsub.s32 0, %v2705
    %v2707 = vrot.slane %v2702, %v2706
    %v2773 = vunpack.c.l.b16 %v2638
    %v2774 = vunpack.c.l.b16 %v2639
    %v2775 = vunpack.c.l.b16 %v2640
    %v2776 = vunpack.c.l.b16 %v2641
    %v2777 = vunpack.c.l.b16 %v2642
    %v2778 = vunpack.c.l.b16 %v2643
    %v2779 = vunpack.c.l.b16 %v2644
    %v2780 = vunpack.c.l.b16 %v2645
    %v2781 = vunpack.c.l.b16 %v2646
    %v2782 = vunpack.c.l.b16 %v2647
    %v2783 = vunpack.c.l.b16 %v2648
    %v2784 = vunpack.c.l.b16 %v2649
    %v2785 = vunpack.c.l.b16 %v2650
    %v2786 = vunpack.c.l.b16 %v2651
    %v2787 = vunpack.c.l.b16 %v2652
    %v2788 = vunpack.c.l.b16 %v2653
    %v2789 = vunpack.c.l.b16 %v2654
    %v2790 = vunpack.c.l.b16 %v2655
    %v2791 = vunpack.c.l.b16 %v2656
    %v2792 = vunpack.c.l.b16 %v2657
    %v2793 = vunpack.c.l.b16 %v2658
    %v2794 = vunpack.c.l.b16 %v2659
    %v2795 = vunpack.c.l.b16 %v2660
    %v2796 = vunpack.c.l.b16 %v2661
    %v2797 = vunpack.c.l.b16 %v2662
    %v2798 = vunpack.c.l.b16 %v2663
    %v2799 = vunpack.c.l.b16 %v2664
    %v2800 = vunpack.c.l.b16 %v2665
    %v2801 = vunpack.c.l.b16 %v2666
    %v2802 = vunpack.c.l.b16 %v2667
    %v2803 = vunpack.c.l.b16 %v2668
    %v2804 = vunpack.c.l.b16 %v2669
    %v2805 = vunpack.c.l.b16 %v2670
    %v2806 = vunpack.c.l.b16 %v2671
    %v2807 = vunpack.c.l.b16 %v2672
    %v2808 = vunpack.c.l.b16 %v2673
    %v2809 = vunpack.c.l.b16 %v2674
    %v2810 = vunpack.c.l.b16 %v2675
    %v2811 = vunpack.c.l.b16 %v2676
    %v2812 = vunpack.c.l.b16 %v2677
    %v2813 = vunpack.c.l.b16 %v2678
    %v2814 = vunpack.c.l.b16 %v2679
    %v2815 = vunpack.c.l.b16 %v2680
    %v2816 = vunpack.c.l.b16 %v2681
    %v2817 = vunpack.c.l.b16 %v2682
    %v2818 = vunpack.c.l.b16 %v2683
    %v2819 = vunpack.c.l.b16 %v2684
    %v2820 = vunpack.c.l.b16 %v2685
    %v2821 = vunpack.c.l.b16 %v2686
    %v2822 = vunpack.c.l.b16 %v2687
    %v2823 = vunpack.c.l.b16 %v2688
    %v2824 = vunpack.c.l.b16 %v2689
    %v2825 = vunpack.c.l.b16 %v2690
    %v2826 = vunpack.c.l.b16 %v2691
    %v2827 = vunpack.c.l.b16 %v2692
    %v2828 = vunpack.c.l.b16 %v2693
    %v2829 = vunpack.c.l.b16 %v2694
    %v2830 = vunpack.c.l.b16 %v2695
    %v2831 = vunpack.c.l.b16 %v2696
    %v2832 = vunpack.c.l.b16 %v2697
    %v2833 = vunpack.c.l.b16 %v2698
    %v2834 = vunpack.c.l.b16 %v2699
    %v2835 = vunpack.c.l.b16 %v2700
    %v2836 = vunpack.c.l.b16 %v2701
    %v2837 = vpack.c.b16 %v2774, %v2773
    %v2838 = vpack.c.b16 %v2776, %v2775
    %v2839 = vpack.c.b16 %v2778, %v2777
    %v2840 = vpack.c.b16 %v2780, %v2779
    %v2841 = vpack.c.b16 %v2782, %v2781
    %v2842 = vpack.c.b16 %v2784, %v2783
    %v2843 = vpack.c.b16 %v2786, %v2785
    %v2844 = vpack.c.b16 %v2788, %v2787
    %v2845 = vpack.c.b16 %v2790, %v2789
    %v2846 = vpack.c.b16 %v2792, %v2791
    %v2847 = vpack.c.b16 %v2794, %v2793
    %v2848 = vpack.c.b16 %v2796, %v2795
    %v2849 = vpack.c.b16 %v2798, %v2797
    %v2850 = vpack.c.b16 %v2800, %v2799
    %v2851 = vpack.c.b16 %v2802, %v2801
    %v2852 = vpack.c.b16 %v2804, %v2803
    %v2853 = vpack.c.b16 %v2806, %v2805
    %v2854 = vpack.c.b16 %v2808, %v2807
    %v2855 = vpack.c.b16 %v2810, %v2809
    %v2856 = vpack.c.b16 %v2812, %v2811
    %v2857 = vpack.c.b16 %v2814, %v2813
    %v2858 = vpack.c.b16 %v2816, %v2815
    %v2859 = vpack.c.b16 %v2818, %v2817
    %v2860 = vpack.c.b16 %v2820, %v2819
    %v2861 = vpack.c.b16 %v2822, %v2821
    %v2862 = vpack.c.b16 %v2824, %v2823
    %v2863 = vpack.c.b16 %v2826, %v2825
    %v2864 = vpack.c.b16 %v2828, %v2827
    %v2865 = vpack.c.b16 %v2830, %v2829
    %v2866 = vpack.c.b16 %v2832, %v2831
    %v2867 = vpack.c.b16 %v2834, %v2833
    %v2868 = vpack.c.b16 %v2836, %v2835
    %2901 = vmatprep.subr.bf16.mxu0 0
    %2902 = vmatpush1.bf16.msra.mxu0 %v2844
    %2903 = vmatprep.subr.bf16.mxu0 0
    %2904 = vmatpush1.bf16.msra.mxu0 %v2843
    %2905 = vmatprep.subr.bf16.mxu0 0
    %2906 = vmatpush1.bf16.msra.mxu0 %v2842
    %2907 = vmatprep.subr.bf16.mxu0 0
    %2908 = vmatpush1.bf16.msra.mxu0 %v2841
    %2909 = vmatprep.subr.bf16.mxu0 0
    %2910 = vmatpush1.bf16.msra.mxu0 %v2840
    %2911 = vmatprep.subr.bf16.mxu0 0
    %2912 = vmatpush1.bf16.msra.mxu0 %v2839
    %2913 = vmatprep.subr.bf16.mxu0 0
    %2914 = vmatpush1.bf16.msra.mxu0 %v2838
    %2915 = vmatprep.subr.bf16.mxu0 0
    %2916 = vmatpush1.bf16.msra.mxu0 %v2837
    %2917 = vmatprep.subr.bf16.mxu0 0
    %2918 = vmatpush2.bf16.msra.mxu0 %v2852
    %2919 = vmatprep.subr.bf16.mxu0 0
    %2920 = vmatpush2.bf16.msra.mxu0 %v2851
    %2921 = vmatprep.subr.bf16.mxu0 0
    %2922 = vmatpush2.bf16.msra.mxu0 %v2850
    %2923 = vmatprep.subr.bf16.mxu0 0
    %2924 = vmatpush2.bf16.msra.mxu0 %v2849
    %2925 = vmatprep.subr.bf16.mxu0 0
    %2926 = vmatpush2.bf16.msra.mxu0 %v2848
    %2927 = vmatprep.subr.bf16.mxu0 0
    %2928 = vmatpush2.bf16.msra.mxu0 %v2847
    %2929 = vmatprep.subr.bf16.mxu0 0
    %2930 = vmatpush2.bf16.msra.mxu0 %v2846
    %2931 = vmatprep.subr.bf16.mxu0 0
    %2932 = vmatpush2.bf16.msra.mxu0 %v2845
    %2933 = vmatprep.mubr.bf16.mxu0 %v2635
    %2934 = vmatmul.mubr.bf16.gmra.mxu0 %v2634
    %v2935 = vpop.f32.mrf.mxu0
    %v2936 = vadd.f32 %v2707, %v2935
    %v2937 = vpop.f32.mrf.mxu0
    %v2938 = vpop.f32.mrf.mxu0
    %v2939 = vadd.f32 %v2707, %v2938
    %v2940 = vpop.f32.mrf.mxu0
    %2941 = vdwg.mxu0
    %2942 = vmatprep.subr.bf16.mxu0 0
    %2943 = vmatpush1.bf16.msra.mxu0 %v2860
    %2944 = vmatprep.subr.bf16.mxu0 0
    %2945 = vmatpush1.bf16.msra.mxu0 %v2859
    %2946 = vmatprep.subr.bf16.mxu0 0
    %2947 = vmatpush1.bf16.msra.mxu0 %v2858
    %2948 = vmatprep.subr.bf16.mxu0 0
    %2949 = vmatpush1.bf16.msra.mxu0 %v2857
    %2950 = vmatprep.subr.bf16.mxu0 0
    %2951 = vmatpush1.bf16.msra.mxu0 %v2856
    %2952 = vmatprep.subr.bf16.mxu0 0
    %2953 = vmatpush1.bf16.msra.mxu0 %v2855
    %2954 = vmatprep.subr.bf16.mxu0 0
    %2955 = vmatpush1.bf16.msra.mxu0 %v2854
    %2956 = vmatprep.subr.bf16.mxu0 0
    %2957 = vmatpush1.bf16.msra.mxu0 %v2853
    %2958 = vmatprep.subr.bf16.mxu0 0
    %2959 = vmatpush2.bf16.msra.mxu0 %v2868
    %2960 = vmatprep.subr.bf16.mxu0 0
    %2961 = vmatpush2.bf16.msra.mxu0 %v2867
    %2962 = vmatprep.subr.bf16.mxu0 0
    %2963 = vmatpush2.bf16.msra.mxu0 %v2866
    %2964 = vmatprep.subr.bf16.mxu0 0
    %2965 = vmatpush2.bf16.msra.mxu0 %v2865
    %2966 = vmatprep.subr.bf16.mxu0 0
    %2967 = vmatpush2.bf16.msra.mxu0 %v2864
    %2968 = vmatprep.subr.bf16.mxu0 0
    %2969 = vmatpush2.bf16.msra.mxu0 %v2863
    %2970 = vmatprep.subr.bf16.mxu0 0
    %2971 = vmatpush2.bf16.msra.mxu0 %v2862
    %2972 = vmatprep.subr.bf16.mxu0 0
    %2973 = vmatpush2.bf16.msra.mxu0 %v2861
    %2974 = vmatprep.mubr.bf16.mxu0 %v2637
    %2975 = vmatmul.mubr.bf16.gmra.mxu0 %v2636
    %v2976 = vpop.f32.mrf.mxu0
    %v2977 = vadd.f32 %v2936, %v2976
    %v2978 = vpop.f32.mrf.mxu0
    %v2979 = vpop.f32.mrf.mxu0
    %v2980 = vadd.f32 %v2939, %v2979
    %v2981 = vpop.f32.mrf.mxu0
    %2982 = vdwg.mxu0
    %2983 = vst [vmem:[#allocation11] sm:$0xff] %v2977
    %2984 = vst [vmem:[#allocation11 + $0x8] sm:$0xff] %v2980
    // Predicated region
    $region50: #{tpu_custom_call.1} parent=1 // pred_check
      _
    $region51: #{tpu_custom_call.1} parent=1 // pred_check_branch
      %2986 = sbr.rel (0) target = $region53
    $region52: #{tpu_custom_call.1} parent=1 // pred_region
      %s2988 = ssub.s32 256, 256
      %2989 = vsyncadd [#allocation4], %s2988
      %s2990 = sshll.u32 [#allocation11], 4
      %s2991 = int_to_ptr.vmem [resolvable:$true] %s2990
      %2996 = dma.vmem_to_hbm [thread:$0]  %s2991, 256, %s7, [#allocation4], 128, 128, 8
    $region53: #{tpu_custom_call.1} parent=1 // pred_fallthru
      _
    // Predicated region
    $region54: #{tpu_custom_call.1} parent=1 // pred_check
      _
    $region55: #{tpu_custom_call.1} parent=1 // pred_check_branch
      %2998 = sbr.rel (0) target = $region57
    $region56: #{tpu_custom_call.1} parent=1 // pred_region
      %2999 = dma.done [#allocation4], 256
    $region57: #{tpu_custom_call.1} parent=1 // pred_fallthru
      _
    %3000 = vsyncpa [#allocation3], 1
    %3001 = vsyncpa [#allocation6], 1
    %3002 = vsyncpa [#allocation9], 1
    %3003 = vsyncpa [#allocation4], 1

</llo_original>
